<compile_context>
chip_gen: v7x
topology: tpu7x:2x2x1
jax: 0.10.0
libtpu: 0.0.40
codegen_flags: <defaults>
</compile_context>

<pallas_src>
import functools

import jax
import jax.numpy as jnp
from jax.experimental import pallas as pl
from jax.experimental.pallas import tpu as pltpu


# -----------------------------------------------------------------------------
# Fused decoder kernel (one batch element per grid step)
# -----------------------------------------------------------------------------
def _decoder_kernel(x_ref, up_ref, g_ref, mask_ref,
                    wt_ref, w1_ref, w2_ref,
                    bt_ref, b1_ref, b2_ref,
                    o_ref, *, h, w):
    hw = h * w

    def shift_flat(src, k):
        # shifted[:, p] = src[:, (p + k) mod hw]   (static lane rotation)
        if k == 0:
            return src
        return jnp.concatenate([src[:, k:], src[:, :k]], axis=1)

    def conv3x3(src, w_mat_ref, bias_ref, relu):
        # src: (Cin, HW) bf16, already in flat lane-dense layout.
        # w_mat_ref: (Cout, 9*Cin) bf16, taps ordered (kh, kw, ci).
        # bias_ref:  (Cout, 1) f32.
        taps = []
        for kh in range(3):
            for kw in range(3):
                t = kh * 3 + kw
                k = ((kh - 1) * w + (kw - 1)) % hw
                sh = shift_flat(src, k)
                # 0/1 mask zeroes the positions whose tap falls outside the
                # image (this implements the pad=1 boundary exactly).
                taps.append(sh * mask_ref[t:t + 1, :])
        im2col = jnp.concatenate(taps, axis=0)                 # (9*Cin, HW) bf16
        acc = jnp.dot(w_mat_ref[...], im2col,
                      preferred_element_type=jnp.float32)      # (Cout, HW) f32
        acc = acc + bias_ref[...]                              # bias once, not per tap
        if relu:
            acc = jnp.maximum(acc, 0.0)
        return acc

    x = x_ref[0]                                               # (Cx, HW)     bf16
    up = up_ref[0]                                             # (Cu, Hu*Wu)  bf16

    # --- ConvTranspose2d(s=2, k=3, p=1, op=1) ---
    # Equivalent to a pad=1 3x3 conv (with flipped / in-out-transposed weights)
    # applied to Z, where Z[2a, 2b] = up[a, b] and zero elsewhere.  Z is built
    # in VMEM with one matmul against the constant selection matrix G.
    z = jnp.dot(up, g_ref[...],
                preferred_element_type=jnp.float32).astype(jnp.bfloat16)  # (Cu, HW)
    up_out = conv3x3(z, wt_ref, bt_ref, relu=False)            # (Cu2, HW) f32

    # --- channel concat fused in VMEM: [x, up_out] ---
    cat = jnp.concatenate([x, up_out.astype(jnp.bfloat16)], axis=0)

    # --- DoubleConv: conv3x3 + ReLU, conv3x3 + ReLU ---
    h1 = conv3x3(cat, w1_ref, b1_ref, relu=True)               # (Cm, HW) f32
    out = conv3x3(h1.astype(jnp.bfloat16), w2_ref, b2_ref, relu=True)

    o_ref[0] = out                                             # lane-dense f32 store


# -----------------------------------------------------------------------------
# One-time parameter preparation (hoisted out of the forward pass)
# -----------------------------------------------------------------------------
def prepare_params(params, x_shape, up_shape):
    _, cx, h, w = x_shape
    _, cu, hu, wu = up_shape
    hw, huwu = h * w, hu * wu

    wt, bt = params["wt"], params["bt"]        # (Cu, Cu2, 3, 3), (Cu2,)
    w1, b1 = params["w1"], params["b1"]        # (Cm, C1, 3, 3),  (Cm,)
    w2, b2 = params["w2"], params["b2"]        # (Cm, Cm, 3, 3),  (Cm,)
    cu2 = wt.shape[1]
    cm, c1 = w1.shape[0], w1.shape[1]

    # ConvTranspose weight -> equivalent regular-conv weight, flattened per tap:
    #   wt_mat[co, (kh*3+kw)*Cu + ci] = wt[ci, co, 2-kh, 2-kw]
    wt_mat = jnp.transpose(wt[:, :, ::-1, ::-1], (1, 2, 3, 0)).reshape(cu2, 9 * cu)
    # Conv2d OIHW -> (Cout, 9*Cin) with tap order (kh, kw, ci)
    w1_mat = jnp.transpose(w1, (0, 2, 3, 1)).reshape(cm, 9 * c1)
    w2_mat = jnp.transpose(w2, (0, 2, 3, 1)).reshape(cm, 9 * w2.shape[1])

    # Zero-interleave (subpixel placement) selection matrix:
    #   G[a*Wu + b, (2a)*W + 2b] = 1
    q = jnp.arange(huwu)
    col = (2 * (q // wu)) * w + 2 * (q % wu)
    g = jnp.zeros((huwu, hw), jnp.float32).at[q, col].set(1.0)

    # 0/1 validity masks of the 9 taps of a pad=1 3x3 conv on the flat layout.
    p = jnp.arange(hw)
    i, j = p // w, p % w
    masks = []
    for kh in range(3):
        for kw in range(3):
            masks.append((i + kh - 1 >= 0) & (i + kh - 1 < h) &
                         (j + kw - 1 >= 0) & (j + kw - 1 < w))
    masks = jnp.stack(masks, axis=0)

    bf = jnp.bfloat16
    return {
        "wt_mat": wt_mat.astype(bf),
        "w1_mat": w1_mat.astype(bf),
        "w2_mat": w2_mat.astype(bf),
        "g": g.astype(bf),
        "masks": masks.astype(bf),
        "bt": bt.reshape(cu2, 1).astype(jnp.float32),
        "b1": b1.reshape(cm, 1).astype(jnp.float32),
        "b2": b2.reshape(cm, 1).astype(jnp.float32),
    }


# -----------------------------------------------------------------------------
# Decoder forward (NCHW in / NCHW out, matching the PyTorch module)
# -----------------------------------------------------------------------------
@jax.jit
def decoder_forward(x_nchw, up_nchw, prep):
    n, cx, h, w = x_nchw.shape
    _, cu, hu, wu = up_nchw.shape
    hw, huwu = h * w, hu * wu
    cm = prep["w2_mat"].shape[0]

    # NCHW -> (N, C, H*W): a free row-major reshape; spatial goes to lanes.
    x_flat = x_nchw.reshape(n, cx, hw).astype(jnp.bfloat16)
    up_flat = up_nchw.reshape(n, cu, huwu).astype(jnp.bfloat16)

    kernel = functools.partial(_decoder_kernel, h=h, w=w)
    out = pl.pallas_call(
        kernel,
        out_shape=jax.ShapeDtypeStruct((n, cm, hw), jnp.float32),
        grid=(n,),
        in_specs=[
            pl.BlockSpec((1, cx, hw), lambda b: (b, 0, 0)),
            pl.BlockSpec((1, cu, huwu), lambda b: (b, 0, 0)),
            pl.BlockSpec(prep["g"].shape, lambda b: (0, 0)),
            pl.BlockSpec(prep["masks"].shape, lambda b: (0, 0)),
            pl.BlockSpec(prep["wt_mat"].shape, lambda b: (0, 0)),
            pl.BlockSpec(prep["w1_mat"].shape, lambda b: (0, 0)),
            pl.BlockSpec(prep["w2_mat"].shape, lambda b: (0, 0)),
            pl.BlockSpec(prep["bt"].shape, lambda b: (0, 0)),
            pl.BlockSpec(prep["b1"].shape, lambda b: (0, 0)),
            pl.BlockSpec(prep["b2"].shape, lambda b: (0, 0)),
        ],
        out_specs=pl.BlockSpec((1, cm, hw), lambda b: (b, 0, 0)),
        compiler_params=pltpu.CompilerParams(
            dimension_semantics=("parallel",),
            vmem_limit_bytes=64 * 1024 * 1024),
    )(x_flat, up_flat, prep["g"], prep["masks"],
      prep["wt_mat"], prep["w1_mat"], prep["w2_mat"],
      prep["bt"], prep["b1"], prep["b2"])

    return out.reshape(n, cm, h, w)


# -----------------------------------------------------------------------------
# Pure-JAX (lax) reference for the correctness check
# -----------------------------------------------------------------------------
def decoder_reference(x, up, params):
    dn = ("NCHW", "OIHW", "NCHW")
    # ConvTranspose2d via lhs-dilated conv with flipped/transposed kernel
    w_eq = jnp.transpose(params["wt"], (1, 0, 2, 3))[:, :, ::-1, ::-1]
    up_o = jax.lax.conv_general_dilated(
        up, w_eq, window_strides=(1, 1), padding=[(1, 2), (1, 2)],
        lhs_dilation=(2, 2), dimension_numbers=dn)
    up_o = up_o + params["bt"][None, :, None, None]
    cat = jnp.concatenate([x, up_o], axis=1)
    h = jax.lax.conv_general_dilated(cat, params["w1"], (1, 1),
                                     [(1, 1), (1, 1)], dimension_numbers=dn)
    h = jnp.maximum(h + params["b1"][None, :, None, None], 0.0)
    o = jax.lax.conv_general_dilated(h, params["w2"], (1, 1),
                                     [(1, 1), (1, 1)], dimension_numbers=dn)
    return jnp.maximum(o + params["b2"][None, :, None, None], 0.0)


# -----------------------------------------------------------------------------
if __name__ == "__main__":
    # Small deterministic problem: Decoder(up_in_channels=8, x_in_channels=4)
    up_in_c, x_in_c = 8, 4
    up_half = up_in_c // 2                 # 4
    in_c = up_half + x_in_c                # 8
    out_c = in_c // 2                      # 4
    B, H, W = 2, 16, 16                    # x spatial; up is (H//2, W//2)

    key = jax.random.PRNGKey(0)
    ks = jax.random.split(key, 8)
    params = {
        # ConvTranspose2d weight: (in_channels, out_channels, kh, kw)
        "wt": 0.1 * jax.random.normal(ks[0], (up_in_c, up_half, 3, 3), jnp.float32),
        "bt": 0.1 * jax.random.normal(ks[1], (up_half,), jnp.float32),
        # Conv2d weights: (out, in, kh, kw)
        "w1": 0.1 * jax.random.normal(ks[2], (out_c, in_c, 3, 3), jnp.float32),
        "b1": 0.1 * jax.random.normal(ks[3], (out_c,), jnp.float32),
        "w2": 0.1 * jax.random.normal(ks[4], (out_c, out_c, 3, 3), jnp.float32),
        "b2": 0.1 * jax.random.normal(ks[5], (out_c,), jnp.float32),
    }

    x = jax.random.normal(ks[6], (B, x_in_c, H, W), jnp.float32)
    up = jax.random.normal(ks[7], (B, up_in_c, H // 2, W // 2), jnp.float32)

    # Hoisted one-time weight / constant preparation.
    prep = prepare_params(params, x.shape, up.shape)

    out = decoder_forward(x, up, prep)
    out = jax.block_until_ready(out)
    assert out.shape == (B, out_c, H, W), out.shape

    ref = jax.block_until_ready(decoder_reference(x, up, params))
    # bf16 matmul operands with f32 accumulation -> ~1e-2 worst-case abs error.
    assert jnp.allclose(out, ref, atol=3e-2, rtol=3e-2), (
        float(jnp.max(jnp.abs(out - ref))))

    print("KERNEL_OK")
</pallas_src>

<mosaic_0001>
module attributes {stable_mosaic.version = 11 : i64} {
  func.func @_decoder_kernel(%arg0: i32, %arg1: memref<1x4x256xbf16, #tpu.memory_space<vmem>>, %arg2: memref<1x8x64xbf16, #tpu.memory_space<vmem>>, %arg3: memref<64x256xbf16, #tpu.memory_space<vmem>>, %arg4: memref<9x256xbf16, #tpu.memory_space<vmem>>, %arg5: memref<4x72xbf16, #tpu.memory_space<vmem>>, %arg6: memref<4x72xbf16, #tpu.memory_space<vmem>>, %arg7: memref<4x36xbf16, #tpu.memory_space<vmem>>, %arg8: memref<4x1xf32, #tpu.memory_space<vmem>>, %arg9: memref<4x1xf32, #tpu.memory_space<vmem>>, %arg10: memref<4x1xf32, #tpu.memory_space<vmem>>, %arg11: memref<1x4x256xf32, #tpu.memory_space<vmem>>) attributes {dimension_semantics = [#tpu.dimension_semantics<parallel>], iteration_bounds = array<i64: 2>, scalar_prefetch = 0 : i64, scratch_operands = 0 : i64, tpu.core_type = #tpu.core_type<tc>, window_params = [{transform_indices = @transform_0, window_bounds = array<i64: 1, 4, 256>}, {transform_indices = @transform_1, window_bounds = array<i64: 1, 8, 64>}, {pipeline_mode = #tpu.pipeline_mode<synchronous>, transform_indices = @transform_2, window_bounds = array<i64: 64, 256>}, {pipeline_mode = #tpu.pipeline_mode<synchronous>, transform_indices = @transform_3, window_bounds = array<i64: 9, 256>}, {pipeline_mode = #tpu.pipeline_mode<synchronous>, transform_indices = @transform_4, window_bounds = array<i64: 4, 72>}, {pipeline_mode = #tpu.pipeline_mode<synchronous>, transform_indices = @transform_5, window_bounds = array<i64: 4, 72>}, {pipeline_mode = #tpu.pipeline_mode<synchronous>, transform_indices = @transform_6, window_bounds = array<i64: 4, 36>}, {pipeline_mode = #tpu.pipeline_mode<synchronous>, transform_indices = @transform_7, window_bounds = array<i64: 4, 1>}, {pipeline_mode = #tpu.pipeline_mode<synchronous>, transform_indices = @transform_8, window_bounds = array<i64: 4, 1>}, {pipeline_mode = #tpu.pipeline_mode<synchronous>, transform_indices = @transform_9, window_bounds = array<i64: 4, 1>}, {transform_indices = @transform_10, window_bounds = array<i64: 1, 4, 256>}]} {
    %c0 = arith.constant 0 : index
    %c0_0 = arith.constant 0 : index
    %c0_1 = arith.constant 0 : index
    %0 = vector.load %arg1[%c0, %c0_0, %c0_1] : memref<1x4x256xbf16, #tpu.memory_space<vmem>>, vector<1x4x256xbf16>
    %1 = vector.shape_cast %0 : vector<1x4x256xbf16> to vector<4x256xbf16>
    %c0_2 = arith.constant 0 : index
    %c0_3 = arith.constant 0 : index
    %c0_4 = arith.constant 0 : index
    %2 = vector.load %arg2[%c0_2, %c0_3, %c0_4] : memref<1x8x64xbf16, #tpu.memory_space<vmem>>, vector<1x8x64xbf16>
    %3 = vector.shape_cast %2 : vector<1x8x64xbf16> to vector<8x64xbf16>
    %c0_5 = arith.constant 0 : index
    %c0_6 = arith.constant 0 : index
    %4 = vector.load %arg3[%c0_5, %c0_6] : memref<64x256xbf16, #tpu.memory_space<vmem>>, vector<64x256xbf16>
    %cst = arith.constant dense<0.000000e+00> : vector<8x256xf32>
    %5 = tpu.matmul %3, %4, %cst {dimension_numbers = #tpu.dot_dimension_numbers<[1], [0], [0], [1], [0, 0, 1, 1], [], []>} : vector<8x64xbf16>, vector<64x256xbf16>, vector<8x256xf32> -> vector<8x256xf32>
    %6 = arith.truncf %5 : vector<8x256xf32> to vector<8x256xbf16>
    %7 = vector.extract_strided_slice %6 {offsets = [0, 239], sizes = [8, 17], strides = [1, 1]} : vector<8x256xbf16> to vector<8x17xbf16>
    %8 = vector.extract_strided_slice %6 {offsets = [0, 0], sizes = [8, 239], strides = [1, 1]} : vector<8x256xbf16> to vector<8x239xbf16>
    %9 = tpu.concatenate %7, %8 in 1 : vector<8x17xbf16>, vector<8x239xbf16> -> vector<8x256xbf16>
    %c0_7 = arith.constant 0 : index
    %c0_8 = arith.constant 0 : index
    %10 = vector.load %arg4[%c0_7, %c0_8] : memref<9x256xbf16, #tpu.memory_space<vmem>>, vector<1x256xbf16>
    %11 = vector.broadcast %10 : vector<1x256xbf16> to vector<8x256xbf16>
    %12 = arith.mulf %9, %11 : vector<8x256xbf16>
    %13 = vector.extract_strided_slice %6 {offsets = [0, 240], sizes = [8, 16], strides = [1, 1]} : vector<8x256xbf16> to vector<8x16xbf16>
    %14 = vector.extract_strided_slice %6 {offsets = [0, 0], sizes = [8, 240], strides = [1, 1]} : vector<8x256xbf16> to vector<8x240xbf16>
    %15 = tpu.concatenate %13, %14 in 1 : vector<8x16xbf16>, vector<8x240xbf16> -> vector<8x256xbf16>
    %c1 = arith.constant 1 : index
    %c0_9 = arith.constant 0 : index
    %16 = vector.load %arg4[%c1, %c0_9] : memref<9x256xbf16, #tpu.memory_space<vmem>>, vector<1x256xbf16>
    %17 = vector.broadcast %16 : vector<1x256xbf16> to vector<8x256xbf16>
    %18 = arith.mulf %15, %17 : vector<8x256xbf16>
    %19 = vector.extract_strided_slice %6 {offsets = [0, 241], sizes = [8, 15], strides = [1, 1]} : vector<8x256xbf16> to vector<8x15xbf16>
    %20 = vector.extract_strided_slice %6 {offsets = [0, 0], sizes = [8, 241], strides = [1, 1]} : vector<8x256xbf16> to vector<8x241xbf16>
    %21 = tpu.concatenate %19, %20 in 1 : vector<8x15xbf16>, vector<8x241xbf16> -> vector<8x256xbf16>
    %c2 = arith.constant 2 : index
    %c0_10 = arith.constant 0 : index
    %22 = vector.load %arg4[%c2, %c0_10] : memref<9x256xbf16, #tpu.memory_space<vmem>>, vector<1x256xbf16>
    %23 = vector.broadcast %22 : vector<1x256xbf16> to vector<8x256xbf16>
    %24 = arith.mulf %21, %23 : vector<8x256xbf16>
    %25 = vector.extract_strided_slice %6 {offsets = [0, 255], sizes = [8, 1], strides = [1, 1]} : vector<8x256xbf16> to vector<8x1xbf16>
    %26 = vector.extract_strided_slice %6 {offsets = [0, 0], sizes = [8, 255], strides = [1, 1]} : vector<8x256xbf16> to vector<8x255xbf16>
    %27 = tpu.concatenate %25, %26 in 1 : vector<8x1xbf16>, vector<8x255xbf16> -> vector<8x256xbf16>
    %c3 = arith.constant 3 : index
    %c0_11 = arith.constant 0 : index
    %28 = vector.load %arg4[%c3, %c0_11] : memref<9x256xbf16, #tpu.memory_space<vmem>>, vector<1x256xbf16>
    %29 = vector.broadcast %28 : vector<1x256xbf16> to vector<8x256xbf16>
    %30 = arith.mulf %27, %29 : vector<8x256xbf16>
    %c4 = arith.constant 4 : index
    %c0_12 = arith.constant 0 : index
    %31 = vector.load %arg4[%c4, %c0_12] : memref<9x256xbf16, #tpu.memory_space<vmem>>, vector<1x256xbf16>
    %32 = vector.broadcast %31 : vector<1x256xbf16> to vector<8x256xbf16>
    %33 = arith.mulf %6, %32 : vector<8x256xbf16>
    %34 = vector.extract_strided_slice %6 {offsets = [0, 1], sizes = [8, 255], strides = [1, 1]} : vector<8x256xbf16> to vector<8x255xbf16>
    %35 = vector.extract_strided_slice %6 {offsets = [0, 0], sizes = [8, 1], strides = [1, 1]} : vector<8x256xbf16> to vector<8x1xbf16>
    %36 = tpu.concatenate %34, %35 in 1 : vector<8x255xbf16>, vector<8x1xbf16> -> vector<8x256xbf16>
    %c5 = arith.constant 5 : index
    %c0_13 = arith.constant 0 : index
    %37 = vector.load %arg4[%c5, %c0_13] : memref<9x256xbf16, #tpu.memory_space<vmem>>, vector<1x256xbf16>
    %38 = vector.broadcast %37 : vector<1x256xbf16> to vector<8x256xbf16>
    %39 = arith.mulf %36, %38 : vector<8x256xbf16>
    %40 = vector.extract_strided_slice %6 {offsets = [0, 15], sizes = [8, 241], strides = [1, 1]} : vector<8x256xbf16> to vector<8x241xbf16>
    %41 = vector.extract_strided_slice %6 {offsets = [0, 0], sizes = [8, 15], strides = [1, 1]} : vector<8x256xbf16> to vector<8x15xbf16>
    %42 = tpu.concatenate %40, %41 in 1 : vector<8x241xbf16>, vector<8x15xbf16> -> vector<8x256xbf16>
    %c6 = arith.constant 6 : index
    %c0_14 = arith.constant 0 : index
    %43 = vector.load %arg4[%c6, %c0_14] : memref<9x256xbf16, #tpu.memory_space<vmem>>, vector<1x256xbf16>
    %44 = vector.broadcast %43 : vector<1x256xbf16> to vector<8x256xbf16>
    %45 = arith.mulf %42, %44 : vector<8x256xbf16>
    %46 = vector.extract_strided_slice %6 {offsets = [0, 16], sizes = [8, 240], strides = [1, 1]} : vector<8x256xbf16> to vector<8x240xbf16>
    %47 = vector.extract_strided_slice %6 {offsets = [0, 0], sizes = [8, 16], strides = [1, 1]} : vector<8x256xbf16> to vector<8x16xbf16>
    %48 = tpu.concatenate %46, %47 in 1 : vector<8x240xbf16>, vector<8x16xbf16> -> vector<8x256xbf16>
    %c7 = arith.constant 7 : index
    %c0_15 = arith.constant 0 : index
    %49 = vector.load %arg4[%c7, %c0_15] : memref<9x256xbf16, #tpu.memory_space<vmem>>, vector<1x256xbf16>
    %50 = vector.broadcast %49 : vector<1x256xbf16> to vector<8x256xbf16>
    %51 = arith.mulf %48, %50 : vector<8x256xbf16>
    %52 = vector.extract_strided_slice %6 {offsets = [0, 17], sizes = [8, 239], strides = [1, 1]} : vector<8x256xbf16> to vector<8x239xbf16>
    %53 = vector.extract_strided_slice %6 {offsets = [0, 0], sizes = [8, 17], strides = [1, 1]} : vector<8x256xbf16> to vector<8x17xbf16>
    %54 = tpu.concatenate %52, %53 in 1 : vector<8x239xbf16>, vector<8x17xbf16> -> vector<8x256xbf16>
    %c8 = arith.constant 8 : index
    %c0_16 = arith.constant 0 : index
    %55 = vector.load %arg4[%c8, %c0_16] : memref<9x256xbf16, #tpu.memory_space<vmem>>, vector<1x256xbf16>
    %56 = vector.broadcast %55 : vector<1x256xbf16> to vector<8x256xbf16>
    %57 = arith.mulf %54, %56 : vector<8x256xbf16>
    %58 = tpu.concatenate %12, %18, %24, %30, %33, %39, %45, %51, %57 in 0 : vector<8x256xbf16>, vector<8x256xbf16>, vector<8x256xbf16>, vector<8x256xbf16>, vector<8x256xbf16>, vector<8x256xbf16>, vector<8x256xbf16>, vector<8x256xbf16>, vector<8x256xbf16> -> vector<72x256xbf16>
    %c0_17 = arith.constant 0 : index
    %c0_18 = arith.constant 0 : index
    %59 = vector.load %arg5[%c0_17, %c0_18] : memref<4x72xbf16, #tpu.memory_space<vmem>>, vector<4x72xbf16>
    %cst_19 = arith.constant dense<0.000000e+00> : vector<4x256xf32>
    %60 = tpu.matmul %59, %58, %cst_19 {dimension_numbers = #tpu.dot_dimension_numbers<[1], [0], [0], [1], [0, 0, 1, 1], [], []>} : vector<4x72xbf16>, vector<72x256xbf16>, vector<4x256xf32> -> vector<4x256xf32>
    %c0_20 = arith.constant 0 : index
    %c0_21 = arith.constant 0 : index
    %61 = vector.load %arg8[%c0_20, %c0_21] : memref<4x1xf32, #tpu.memory_space<vmem>>, vector<4x1xf32>
    %62 = vector.broadcast %61 : vector<4x1xf32> to vector<4x256xf32>
    %63 = arith.addf %60, %62 : vector<4x256xf32>
    %64 = arith.truncf %63 : vector<4x256xf32> to vector<4x256xbf16>
    %65 = tpu.concatenate %1, %64 in 0 : vector<4x256xbf16>, vector<4x256xbf16> -> vector<8x256xbf16>
    %66 = vector.extract_strided_slice %65 {offsets = [0, 239], sizes = [8, 17], strides = [1, 1]} : vector<8x256xbf16> to vector<8x17xbf16>
    %67 = vector.extract_strided_slice %65 {offsets = [0, 0], sizes = [8, 239], strides = [1, 1]} : vector<8x256xbf16> to vector<8x239xbf16>
    %68 = tpu.concatenate %66, %67 in 1 : vector<8x17xbf16>, vector<8x239xbf16> -> vector<8x256xbf16>
    %c0_22 = arith.constant 0 : index
    %c0_23 = arith.constant 0 : index
    %69 = vector.load %arg4[%c0_22, %c0_23] : memref<9x256xbf16, #tpu.memory_space<vmem>>, vector<1x256xbf16>
    %70 = vector.broadcast %69 : vector<1x256xbf16> to vector<8x256xbf16>
    %71 = arith.mulf %68, %70 : vector<8x256xbf16>
    %72 = vector.extract_strided_slice %65 {offsets = [0, 240], sizes = [8, 16], strides = [1, 1]} : vector<8x256xbf16> to vector<8x16xbf16>
    %73 = vector.extract_strided_slice %65 {offsets = [0, 0], sizes = [8, 240], strides = [1, 1]} : vector<8x256xbf16> to vector<8x240xbf16>
    %74 = tpu.concatenate %72, %73 in 1 : vector<8x16xbf16>, vector<8x240xbf16> -> vector<8x256xbf16>
    %c1_24 = arith.constant 1 : index
    %c0_25 = arith.constant 0 : index
    %75 = vector.load %arg4[%c1_24, %c0_25] : memref<9x256xbf16, #tpu.memory_space<vmem>>, vector<1x256xbf16>
    %76 = vector.broadcast %75 : vector<1x256xbf16> to vector<8x256xbf16>
    %77 = arith.mulf %74, %76 : vector<8x256xbf16>
    %78 = vector.extract_strided_slice %65 {offsets = [0, 241], sizes = [8, 15], strides = [1, 1]} : vector<8x256xbf16> to vector<8x15xbf16>
    %79 = vector.extract_strided_slice %65 {offsets = [0, 0], sizes = [8, 241], strides = [1, 1]} : vector<8x256xbf16> to vector<8x241xbf16>
    %80 = tpu.concatenate %78, %79 in 1 : vector<8x15xbf16>, vector<8x241xbf16> -> vector<8x256xbf16>
    %c2_26 = arith.constant 2 : index
    %c0_27 = arith.constant 0 : index
    %81 = vector.load %arg4[%c2_26, %c0_27] : memref<9x256xbf16, #tpu.memory_space<vmem>>, vector<1x256xbf16>
    %82 = vector.broadcast %81 : vector<1x256xbf16> to vector<8x256xbf16>
    %83 = arith.mulf %80, %82 : vector<8x256xbf16>
    %84 = vector.extract_strided_slice %65 {offsets = [0, 255], sizes = [8, 1], strides = [1, 1]} : vector<8x256xbf16> to vector<8x1xbf16>
    %85 = vector.extract_strided_slice %65 {offsets = [0, 0], sizes = [8, 255], strides = [1, 1]} : vector<8x256xbf16> to vector<8x255xbf16>
    %86 = tpu.concatenate %84, %85 in 1 : vector<8x1xbf16>, vector<8x255xbf16> -> vector<8x256xbf16>
    %c3_28 = arith.constant 3 : index
    %c0_29 = arith.constant 0 : index
    %87 = vector.load %arg4[%c3_28, %c0_29] : memref<9x256xbf16, #tpu.memory_space<vmem>>, vector<1x256xbf16>
    %88 = vector.broadcast %87 : vector<1x256xbf16> to vector<8x256xbf16>
    %89 = arith.mulf %86, %88 : vector<8x256xbf16>
    %c4_30 = arith.constant 4 : index
    %c0_31 = arith.constant 0 : index
    %90 = vector.load %arg4[%c4_30, %c0_31] : memref<9x256xbf16, #tpu.memory_space<vmem>>, vector<1x256xbf16>
    %91 = vector.broadcast %90 : vector<1x256xbf16> to vector<8x256xbf16>
    %92 = arith.mulf %65, %91 : vector<8x256xbf16>
    %93 = vector.extract_strided_slice %65 {offsets = [0, 1], sizes = [8, 255], strides = [1, 1]} : vector<8x256xbf16> to vector<8x255xbf16>
    %94 = vector.extract_strided_slice %65 {offsets = [0, 0], sizes = [8, 1], strides = [1, 1]} : vector<8x256xbf16> to vector<8x1xbf16>
    %95 = tpu.concatenate %93, %94 in 1 : vector<8x255xbf16>, vector<8x1xbf16> -> vector<8x256xbf16>
    %c5_32 = arith.constant 5 : index
    %c0_33 = arith.constant 0 : index
    %96 = vector.load %arg4[%c5_32, %c0_33] : memref<9x256xbf16, #tpu.memory_space<vmem>>, vector<1x256xbf16>
    %97 = vector.broadcast %96 : vector<1x256xbf16> to vector<8x256xbf16>
    %98 = arith.mulf %95, %97 : vector<8x256xbf16>
    %99 = vector.extract_strided_slice %65 {offsets = [0, 15], sizes = [8, 241], strides = [1, 1]} : vector<8x256xbf16> to vector<8x241xbf16>
    %100 = vector.extract_strided_slice %65 {offsets = [0, 0], sizes = [8, 15], strides = [1, 1]} : vector<8x256xbf16> to vector<8x15xbf16>
    %101 = tpu.concatenate %99, %100 in 1 : vector<8x241xbf16>, vector<8x15xbf16> -> vector<8x256xbf16>
    %c6_34 = arith.constant 6 : index
    %c0_35 = arith.constant 0 : index
    %102 = vector.load %arg4[%c6_34, %c0_35] : memref<9x256xbf16, #tpu.memory_space<vmem>>, vector<1x256xbf16>
    %103 = vector.broadcast %102 : vector<1x256xbf16> to vector<8x256xbf16>
    %104 = arith.mulf %101, %103 : vector<8x256xbf16>
    %105 = vector.extract_strided_slice %65 {offsets = [0, 16], sizes = [8, 240], strides = [1, 1]} : vector<8x256xbf16> to vector<8x240xbf16>
    %106 = vector.extract_strided_slice %65 {offsets = [0, 0], sizes = [8, 16], strides = [1, 1]} : vector<8x256xbf16> to vector<8x16xbf16>
    %107 = tpu.concatenate %105, %106 in 1 : vector<8x240xbf16>, vector<8x16xbf16> -> vector<8x256xbf16>
    %c7_36 = arith.constant 7 : index
    %c0_37 = arith.constant 0 : index
    %108 = vector.load %arg4[%c7_36, %c0_37] : memref<9x256xbf16, #tpu.memory_space<vmem>>, vector<1x256xbf16>
    %109 = vector.broadcast %108 : vector<1x256xbf16> to vector<8x256xbf16>
    %110 = arith.mulf %107, %109 : vector<8x256xbf16>
    %111 = vector.extract_strided_slice %65 {offsets = [0, 17], sizes = [8, 239], strides = [1, 1]} : vector<8x256xbf16> to vector<8x239xbf16>
    %112 = vector.extract_strided_slice %65 {offsets = [0, 0], sizes = [8, 17], strides = [1, 1]} : vector<8x256xbf16> to vector<8x17xbf16>
    %113 = tpu.concatenate %111, %112 in 1 : vector<8x239xbf16>, vector<8x17xbf16> -> vector<8x256xbf16>
    %c8_38 = arith.constant 8 : index
    %c0_39 = arith.constant 0 : index
    %114 = vector.load %arg4[%c8_38, %c0_39] : memref<9x256xbf16, #tpu.memory_space<vmem>>, vector<1x256xbf16>
    %115 = vector.broadcast %114 : vector<1x256xbf16> to vector<8x256xbf16>
    %116 = arith.mulf %113, %115 : vector<8x256xbf16>
    %117 = tpu.concatenate %71, %77, %83, %89, %92, %98, %104, %110, %116 in 0 : vector<8x256xbf16>, vector<8x256xbf16>, vector<8x256xbf16>, vector<8x256xbf16>, vector<8x256xbf16>, vector<8x256xbf16>, vector<8x256xbf16>, vector<8x256xbf16>, vector<8x256xbf16> -> vector<72x256xbf16>
    %c0_40 = arith.constant 0 : index
    %c0_41 = arith.constant 0 : index
    %118 = vector.load %arg6[%c0_40, %c0_41] : memref<4x72xbf16, #tpu.memory_space<vmem>>, vector<4x72xbf16>
    %cst_42 = arith.constant dense<0.000000e+00> : vector<4x256xf32>
    %119 = tpu.matmul %118, %117, %cst_42 {dimension_numbers = #tpu.dot_dimension_numbers<[1], [0], [0], [1], [0, 0, 1, 1], [], []>} : vector<4x72xbf16>, vector<72x256xbf16>, vector<4x256xf32> -> vector<4x256xf32>
    %c0_43 = arith.constant 0 : index
    %c0_44 = arith.constant 0 : index
    %120 = vector.load %arg9[%c0_43, %c0_44] : memref<4x1xf32, #tpu.memory_space<vmem>>, vector<4x1xf32>
    %121 = vector.broadcast %120 : vector<4x1xf32> to vector<4x256xf32>
    %122 = arith.addf %119, %121 : vector<4x256xf32>
    %cst_45 = arith.constant 0.000000e+00 : f32
    %123 = vector.broadcast %cst_45 : f32 to vector<4x256xf32>
    %124 = arith.maximumf %122, %123 : vector<4x256xf32>
    %125 = arith.truncf %124 : vector<4x256xf32> to vector<4x256xbf16>
    %126 = vector.extract_strided_slice %125 {offsets = [0, 239], sizes = [4, 17], strides = [1, 1]} : vector<4x256xbf16> to vector<4x17xbf16>
    %127 = vector.extract_strided_slice %125 {offsets = [0, 0], sizes = [4, 239], strides = [1, 1]} : vector<4x256xbf16> to vector<4x239xbf16>
    %128 = tpu.concatenate %126, %127 in 1 : vector<4x17xbf16>, vector<4x239xbf16> -> vector<4x256xbf16>
    %c0_46 = arith.constant 0 : index
    %c0_47 = arith.constant 0 : index
    %129 = vector.load %arg4[%c0_46, %c0_47] : memref<9x256xbf16, #tpu.memory_space<vmem>>, vector<1x256xbf16>
    %130 = vector.broadcast %129 : vector<1x256xbf16> to vector<4x256xbf16>
    %131 = arith.mulf %128, %130 : vector<4x256xbf16>
    %132 = vector.extract_strided_slice %125 {offsets = [0, 240], sizes = [4, 16], strides = [1, 1]} : vector<4x256xbf16> to vector<4x16xbf16>
    %133 = vector.extract_strided_slice %125 {offsets = [0, 0], sizes = [4, 240], strides = [1, 1]} : vector<4x256xbf16> to vector<4x240xbf16>
    %134 = tpu.concatenate %132, %133 in 1 : vector<4x16xbf16>, vector<4x240xbf16> -> vector<4x256xbf16>
    %c1_48 = arith.constant 1 : index
    %c0_49 = arith.constant 0 : index
    %135 = vector.load %arg4[%c1_48, %c0_49] : memref<9x256xbf16, #tpu.memory_space<vmem>>, vector<1x256xbf16>
    %136 = vector.broadcast %135 : vector<1x256xbf16> to vector<4x256xbf16>
    %137 = arith.mulf %134, %136 : vector<4x256xbf16>
    %138 = vector.extract_strided_slice %125 {offsets = [0, 241], sizes = [4, 15], strides = [1, 1]} : vector<4x256xbf16> to vector<4x15xbf16>
    %139 = vector.extract_strided_slice %125 {offsets = [0, 0], sizes = [4, 241], strides = [1, 1]} : vector<4x256xbf16> to vector<4x241xbf16>
    %140 = tpu.concatenate %138, %139 in 1 : vector<4x15xbf16>, vector<4x241xbf16> -> vector<4x256xbf16>
    %c2_50 = arith.constant 2 : index
    %c0_51 = arith.constant 0 : index
    %141 = vector.load %arg4[%c2_50, %c0_51] : memref<9x256xbf16, #tpu.memory_space<vmem>>, vector<1x256xbf16>
    %142 = vector.broadcast %141 : vector<1x256xbf16> to vector<4x256xbf16>
    %143 = arith.mulf %140, %142 : vector<4x256xbf16>
    %144 = vector.extract_strided_slice %125 {offsets = [0, 255], sizes = [4, 1], strides = [1, 1]} : vector<4x256xbf16> to vector<4x1xbf16>
    %145 = vector.extract_strided_slice %125 {offsets = [0, 0], sizes = [4, 255], strides = [1, 1]} : vector<4x256xbf16> to vector<4x255xbf16>
    %146 = tpu.concatenate %144, %145 in 1 : vector<4x1xbf16>, vector<4x255xbf16> -> vector<4x256xbf16>
    %c3_52 = arith.constant 3 : index
    %c0_53 = arith.constant 0 : index
    %147 = vector.load %arg4[%c3_52, %c0_53] : memref<9x256xbf16, #tpu.memory_space<vmem>>, vector<1x256xbf16>
    %148 = vector.broadcast %147 : vector<1x256xbf16> to vector<4x256xbf16>
    %149 = arith.mulf %146, %148 : vector<4x256xbf16>
    %c4_54 = arith.constant 4 : index
    %c0_55 = arith.constant 0 : index
    %150 = vector.load %arg4[%c4_54, %c0_55] : memref<9x256xbf16, #tpu.memory_space<vmem>>, vector<1x256xbf16>
    %151 = vector.broadcast %150 : vector<1x256xbf16> to vector<4x256xbf16>
    %152 = arith.mulf %125, %151 : vector<4x256xbf16>
    %153 = vector.extract_strided_slice %125 {offsets = [0, 1], sizes = [4, 255], strides = [1, 1]} : vector<4x256xbf16> to vector<4x255xbf16>
    %154 = vector.extract_strided_slice %125 {offsets = [0, 0], sizes = [4, 1], strides = [1, 1]} : vector<4x256xbf16> to vector<4x1xbf16>
    %155 = tpu.concatenate %153, %154 in 1 : vector<4x255xbf16>, vector<4x1xbf16> -> vector<4x256xbf16>
    %c5_56 = arith.constant 5 : index
    %c0_57 = arith.constant 0 : index
    %156 = vector.load %arg4[%c5_56, %c0_57] : memref<9x256xbf16, #tpu.memory_space<vmem>>, vector<1x256xbf16>
    %157 = vector.broadcast %156 : vector<1x256xbf16> to vector<4x256xbf16>
    %158 = arith.mulf %155, %157 : vector<4x256xbf16>
    %159 = vector.extract_strided_slice %125 {offsets = [0, 15], sizes = [4, 241], strides = [1, 1]} : vector<4x256xbf16> to vector<4x241xbf16>
    %160 = vector.extract_strided_slice %125 {offsets = [0, 0], sizes = [4, 15], strides = [1, 1]} : vector<4x256xbf16> to vector<4x15xbf16>
    %161 = tpu.concatenate %159, %160 in 1 : vector<4x241xbf16>, vector<4x15xbf16> -> vector<4x256xbf16>
    %c6_58 = arith.constant 6 : index
    %c0_59 = arith.constant 0 : index
    %162 = vector.load %arg4[%c6_58, %c0_59] : memref<9x256xbf16, #tpu.memory_space<vmem>>, vector<1x256xbf16>
    %163 = vector.broadcast %162 : vector<1x256xbf16> to vector<4x256xbf16>
    %164 = arith.mulf %161, %163 : vector<4x256xbf16>
    %165 = vector.extract_strided_slice %125 {offsets = [0, 16], sizes = [4, 240], strides = [1, 1]} : vector<4x256xbf16> to vector<4x240xbf16>
    %166 = vector.extract_strided_slice %125 {offsets = [0, 0], sizes = [4, 16], strides = [1, 1]} : vector<4x256xbf16> to vector<4x16xbf16>
    %167 = tpu.concatenate %165, %166 in 1 : vector<4x240xbf16>, vector<4x16xbf16> -> vector<4x256xbf16>
    %c7_60 = arith.constant 7 : index
    %c0_61 = arith.constant 0 : index
    %168 = vector.load %arg4[%c7_60, %c0_61] : memref<9x256xbf16, #tpu.memory_space<vmem>>, vector<1x256xbf16>
    %169 = vector.broadcast %168 : vector<1x256xbf16> to vector<4x256xbf16>
    %170 = arith.mulf %167, %169 : vector<4x256xbf16>
    %171 = vector.extract_strided_slice %125 {offsets = [0, 17], sizes = [4, 239], strides = [1, 1]} : vector<4x256xbf16> to vector<4x239xbf16>
    %172 = vector.extract_strided_slice %125 {offsets = [0, 0], sizes = [4, 17], strides = [1, 1]} : vector<4x256xbf16> to vector<4x17xbf16>
    %173 = tpu.concatenate %171, %172 in 1 : vector<4x239xbf16>, vector<4x17xbf16> -> vector<4x256xbf16>
    %c8_62 = arith.constant 8 : index
    %c0_63 = arith.constant 0 : index
    %174 = vector.load %arg4[%c8_62, %c0_63] : memref<9x256xbf16, #tpu.memory_space<vmem>>, vector<1x256xbf16>
    %175 = vector.broadcast %174 : vector<1x256xbf16> to vector<4x256xbf16>
    %176 = arith.mulf %173, %175 : vector<4x256xbf16>
    %177 = tpu.concatenate %131, %137, %143, %149, %152, %158, %164, %170, %176 in 0 : vector<4x256xbf16>, vector<4x256xbf16>, vector<4x256xbf16>, vector<4x256xbf16>, vector<4x256xbf16>, vector<4x256xbf16>, vector<4x256xbf16>, vector<4x256xbf16>, vector<4x256xbf16> -> vector<36x256xbf16>
    %c0_64 = arith.constant 0 : index
    %c0_65 = arith.constant 0 : index
    %178 = vector.load %arg7[%c0_64, %c0_65] : memref<4x36xbf16, #tpu.memory_space<vmem>>, vector<4x36xbf16>
    %cst_66 = arith.constant dense<0.000000e+00> : vector<4x256xf32>
    %179 = tpu.matmul %178, %177, %cst_66 {dimension_numbers = #tpu.dot_dimension_numbers<[1], [0], [0], [1], [0, 0, 1, 1], [], []>} : vector<4x36xbf16>, vector<36x256xbf16>, vector<4x256xf32> -> vector<4x256xf32>
    %c0_67 = arith.constant 0 : index
    %c0_68 = arith.constant 0 : index
    %180 = vector.load %arg10[%c0_67, %c0_68] : memref<4x1xf32, #tpu.memory_space<vmem>>, vector<4x1xf32>
    %181 = vector.broadcast %180 : vector<4x1xf32> to vector<4x256xf32>
    %182 = arith.addf %179, %181 : vector<4x256xf32>
    %cst_69 = arith.constant 0.000000e+00 : f32
    %183 = vector.broadcast %cst_69 : f32 to vector<4x256xf32>
    %184 = arith.maximumf %182, %183 : vector<4x256xf32>
    %c0_70 = arith.constant 0 : index
    %c0_71 = arith.constant 0 : index
    %c0_72 = arith.constant 0 : index
    %185 = vector.load %arg11[%c0_70, %c0_71, %c0_72] : memref<1x4x256xf32, #tpu.memory_space<vmem>>, vector<1x4x256xf32>
    %186 = vector.shape_cast %185 : vector<1x4x256xf32> to vector<4x256xf32>
    %187 = vector.shape_cast %184 : vector<4x256xf32> to vector<1x4x256xf32>
    tpu.vector_store %arg11[%c0_70, %c0_71, %c0_72], %187 {strides = array<i32>} : memref<1x4x256xf32, #tpu.memory_space<vmem>>, vector<1x4x256xf32>,
    return
  }
  func.func @transform_0(%arg0: i32) -> (i32, i32, i32) {
    %c0_i32 = arith.constant 0 : i32
    %c0_i32_0 = arith.constant 0 : i32
    %c0_i32_1 = arith.constant 0 : i32
    return %arg0, %c0_i32, %c0_i32_0 : i32, i32, i32
  }
  func.func @transform_1(%arg0: i32) -> (i32, i32, i32) {
    %c0_i32 = arith.constant 0 : i32
    %c0_i32_0 = arith.constant 0 : i32
    %c0_i32_1 = arith.constant 0 : i32
    return %arg0, %c0_i32, %c0_i32_0 : i32, i32, i32
  }
  func.func @transform_2(%arg0: i32) -> (i32, i32) {
    %c0_i32 = arith.constant 0 : i32
    %c0_i32_0 = arith.constant 0 : i32
    %c0_i32_1 = arith.constant 0 : i32
    return %c0_i32, %c0_i32_0 : i32, i32
  }
  func.func @transform_3(%arg0: i32) -> (i32, i32) {
    %c0_i32 = arith.constant 0 : i32
    %c0_i32_0 = arith.constant 0 : i32
    %c0_i32_1 = arith.constant 0 : i32
    return %c0_i32, %c0_i32_0 : i32, i32
  }
  func.func @transform_4(%arg0: i32) -> (i32, i32) {
    %c0_i32 = arith.constant 0 : i32
    %c0_i32_0 = arith.constant 0 : i32
    %c0_i32_1 = arith.constant 0 : i32
    return %c0_i32, %c0_i32_0 : i32, i32
  }
  func.func @transform_5(%arg0: i32) -> (i32, i32) {
    %c0_i32 = arith.constant 0 : i32
    %c0_i32_0 = arith.constant 0 : i32
    %c0_i32_1 = arith.constant 0 : i32
    return %c0_i32, %c0_i32_0 : i32, i32
  }
  func.func @transform_6(%arg0: i32) -> (i32, i32) {
    %c0_i32 = arith.constant 0 : i32
    %c0_i32_0 = arith.constant 0 : i32
    %c0_i32_1 = arith.constant 0 : i32
    return %c0_i32, %c0_i32_0 : i32, i32
  }
  func.func @transform_7(%arg0: i32) -> (i32, i32) {
    %c0_i32 = arith.constant 0 : i32
    %c0_i32_0 = arith.constant 0 : i32
    %c0_i32_1 = arith.constant 0 : i32
    return %c0_i32, %c0_i32_0 : i32, i32
  }
  func.func @transform_8(%arg0: i32) -> (i32, i32) {
    %c0_i32 = arith.constant 0 : i32
    %c0_i32_0 = arith.constant 0 : i32
    %c0_i32_1 = arith.constant 0 : i32
    return %c0_i32, %c0_i32_0 : i32, i32
  }
  func.func @transform_9(%arg0: i32) -> (i32, i32) {
    %c0_i32 = arith.constant 0 : i32
    %c0_i32_0 = arith.constant 0 : i32
    %c0_i32_1 = arith.constant 0 : i32
    return %c0_i32, %c0_i32_0 : i32, i32
  }
  func.func @transform_10(%arg0: i32) -> (i32, i32, i32) {
    %c0_i32 = arith.constant 0 : i32
    %c0_i32_0 = arith.constant 0 : i32
    %c0_i32_1 = arith.constant 0 : i32
    return %arg0, %c0_i32, %c0_i32_0 : i32, i32, i32
  }
}

</mosaic_0001>

<llo_original>
// kernel: decoder_forward.1
$region0: #{decoder_forward.1}
  #allocation0 [shape = 'u32[]', space=smem, size = 0x4, offset = 0x4, fixed_abs, tag = 'smem constant byte address 0x4 - core index']
  #allocation1 [shape = 'u32[144,128]{1,0:T(1,128)}', space=vmem, size = 0x12000, scoped, tag = 'internal scratch']
  %s0 = inlined_call_operand.hbm [shape: bf16[2,4,256], index: 0, kind: input, shape index: {}]
  %s1 = inlined_call_operand.hbm [shape: bf16[2,8,64], index: 1, kind: input, shape index: {}]
  %s2 = inlined_call_operand.hbm [shape: bf16[64,256], index: 2, kind: input, shape index: {}]
  %s3 = inlined_call_operand.hbm [shape: bf16[9,256], index: 3, kind: input, shape index: {}]
  %s4 = inlined_call_operand.hbm [shape: bf16[4,72], index: 4, kind: input, shape index: {}]
  %s5 = inlined_call_operand.hbm [shape: bf16[4,72], index: 5, kind: input, shape index: {}]
  %s6 = inlined_call_operand.hbm [shape: bf16[4,36], index: 6, kind: input, shape index: {}]
  %s7 = inlined_call_operand.hbm [shape: f32[4,1], index: 7, kind: input, shape index: {}]
  %s8 = inlined_call_operand.hbm [shape: f32[4,1], index: 8, kind: input, shape index: {}]
  %s9 = inlined_call_operand.hbm [shape: f32[4,1], index: 9, kind: input, shape index: {}]
  %s10 = inlined_call_operand.hbm [shape: f32[2,4,256], index: 10, kind: output, shape index: {}]
  %s11 = sld [smem:[#allocation0]]
  $region113: #{decoder_forward.1} parent=0
    _
  %s13 = ssub.s32 1, %s11
  %s14 = scalar_select 0, %s13, %s11
  $region1: #{decoder_forward.1} parent=0
    #allocation2 [shape = 'u8[4096]{0}', space=vmem, size = 0x1000, scoped, tag = 'input window, operand 0']
    #allocation3 [shape = 's32[2]{0}', space=sflag, size = 0x8, scoped, tag = 'scoped memory for decoder_forward.1']
    #allocation4 [shape = 's32[2]{0}', space=sflag, size = 0x8, scoped, tag = 'scoped memory for decoder_forward.1']
    #allocation5 [shape = 'u8[4096]{0}', space=vmem, size = 0x1000, scoped, tag = 'input window, operand 1']
    #allocation6 [shape = 's32[2]{0}', space=sflag, size = 0x8, scoped, tag = 'scoped memory for decoder_forward.1']
    #allocation7 [shape = 'u8[32768]{0}', space=vmem, size = 0x8000, scoped, tag = 'input window, operand 2, single buffered']
    #allocation8 [shape = 'u8[8192]{0}', space=vmem, size = 0x2000, scoped, tag = 'input window, operand 3, single buffered']
    #allocation9 [shape = 's32[1]{0}', space=sflag, size = 0x4, scoped, tag = 'scoped memory for decoder_forward.1']
    #allocation10 [shape = 'u8[1024]{0}', space=vmem, size = 0x400, scoped, tag = 'input window, operand 4, single buffered']
    #allocation11 [shape = 'u8[1024]{0}', space=vmem, size = 0x400, scoped, tag = 'input window, operand 5, single buffered']
    #allocation12 [shape = 's32[1]{0}', space=sflag, size = 0x4, scoped, tag = 'scoped memory for decoder_forward.1']
    #allocation13 [shape = 'u8[1024]{0}', space=vmem, size = 0x400, scoped, tag = 'input window, operand 6, single buffered']
    #allocation14 [shape = 'u8[2048]{0}', space=vmem, size = 0x800, scoped, tag = 'input window, operand 7, single buffered']
    #allocation15 [shape = 's32[1]{0}', space=sflag, size = 0x4, scoped, tag = 'scoped memory for decoder_forward.1']
    #allocation16 [shape = 'u8[2048]{0}', space=vmem, size = 0x800, scoped, tag = 'input window, operand 8, single buffered']
    #allocation17 [shape = 'u8[2048]{0}', space=vmem, size = 0x800, scoped, tag = 'input window, operand 9, single buffered']
    #allocation18 [shape = 's32[1]{0}', space=sflag, size = 0x4, scoped, tag = 'scoped memory for decoder_forward.1']
    #allocation19 [shape = 'u8[8192]{0}', space=vmem, size = 0x2000, scoped, tag = 'output window, operand 0']
    %15 = vsyncpa [#allocation3], 0
    %s16 = scalar_lea.sflag [#allocation3], 1
    %17 = vsyncpa %s16, 0
    %18 = vsyncpa [#allocation6], 0
    %s19 = scalar_lea.sflag [#allocation6], 1
    %20 = vsyncpa %s19, 0
    %21 = vsyncpa [#allocation9], 0
    %22 = vsyncpa [#allocation12], 0
    %23 = vsyncpa [#allocation15], 0
    %24 = vsyncpa [#allocation18], 0
    %25 = vsyncpa [#allocation4], 0
    %s26 = scalar_lea.sflag [#allocation4], 1
    %27 = vsyncpa %s26, 0
    loop: start=0, step=1, limit=4
    $region2: #{decoder_forward.1} parent=1 // loop_pre_header
      _
    $region3: #{decoder_forward.1} parent=1 // loop_header
      %s29 = sphi 0, %s33
      %p30 = scmp.ge.s32.totalorder %s29, 4
      %s39 = sphi 0, %s41
      %s42 = sphi 0, %s39
      %s43 = sphi 0, %s42
      %s59 = sphi 0, %s43
      %s65 = sphi 0, %s67
      %s68 = sphi 0, %s65
      %s69 = sphi 0, %s68
      %s85 = sphi 0, %s69
      %s89 = sphi 0, %s89
      %s91 = sphi 0, %s89
      %s92 = sphi 0, %s91
      %s106 = sphi 0, %s92
      %s110 = sphi 0, %s110
      %s112 = sphi 0, %s110
      %s113 = sphi 0, %s112
      %s127 = sphi 0, %s113
      %s131 = sphi 0, %s131
      %s133 = sphi 0, %s131
      %s134 = sphi 0, %s133
      %s148 = sphi 0, %s134
      %s152 = sphi 0, %s152
      %s154 = sphi 0, %s152
      %s155 = sphi 0, %s154
      %s169 = sphi 0, %s155
      %s173 = sphi 0, %s173
      %s175 = sphi 0, %s173
      %s176 = sphi 0, %s175
      %s190 = sphi 0, %s176
      %s194 = sphi 0, %s194
      %s196 = sphi 0, %s194
      %s197 = sphi 0, %s196
      %s211 = sphi 0, %s197
      %s215 = sphi 0, %s215
      %s217 = sphi 0, %s215
      %s218 = sphi 0, %s217
      %s232 = sphi 0, %s218
      %s236 = sphi 0, %s236
      %s238 = sphi 0, %s236
      %s239 = sphi 0, %s238
      %s253 = sphi 0, %s239
      %s259 = sphi 0, %s261
      %s262 = sphi 0, %s259
      %s263 = sphi 0, %s262
      %s279 = sphi 0, %s263
    $region4: #{decoder_forward.1} parent=1 // loop_header_branch
      %32 = sbr.rel (%p30) target = $region8
    $region5: #{decoder_forward.1} parent=1 // loop_body
      %s34 = ssub.s32 %s29, 1
      %s35 = ssub.s32 %s29, 2
      %s36 = sadd.s32 %s29, 1
      %s37 = ssub.s32 %s29, %s36
      %p38 = scmp.eq.s32.totalorder %s37, 0
      %s40 = sadd.s32 %s39, 1
      %s41 = scalar_select %p38, %s39, %s40
      %p44 = pneg %p38
      %p45 = scmp.eq.s32.totalorder %s29, 1
      %p46 = por %p44, %p45
      %p47 = scmp.ne.s32.totalorder %s39, %s42
      %p48 = scmp.eq.s32.totalorder %s29, 0
      %p49 = por %p47, %p48
      %p50 = scmp.ne.s32.totalorder %s39, %s42
      %p51 = scmp.eq.s32.totalorder %s34, 1
      %p52 = por %p50, %p51
      %p53 = scmp.ne.s32.totalorder %s42, %s43
      %p54 = scmp.eq.s32.totalorder %s34, 0
      %p55 = por %p53, %p54
      %p56 = scmp.ne.s32.totalorder %s42, %s43
      %p57 = scmp.eq.s32.totalorder %s35, 1
      %p58 = por %p56, %p57
      %p60 = scmp.ne.s32.totalorder %s43, %s59
      %p61 = scmp.eq.s32.totalorder %s35, 0
      %p62 = por %p60, %p61
      %s63 = ssub.s32 %s29, %s36
      %p64 = scmp.eq.s32.totalorder %s63, 0
      %s66 = sadd.s32 %s65, 1
      %s67 = scalar_select %p64, %s65, %s66
      %p70 = pneg %p64
      %p71 = scmp.eq.s32.totalorder %s29, 1
      %p72 = por %p70, %p71
      %p73 = scmp.ne.s32.totalorder %s65, %s68
      %p74 = scmp.eq.s32.totalorder %s29, 0
      %p75 = por %p73, %p74
      %p76 = scmp.ne.s32.totalorder %s65, %s68
      %p77 = scmp.eq.s32.totalorder %s34, 1
      %p78 = por %p76, %p77
      %p79 = scmp.ne.s32.totalorder %s68, %s69
      %p80 = scmp.eq.s32.totalorder %s34, 0
      %p81 = por %p79, %p80
      %p82 = scmp.ne.s32.totalorder %s68, %s69
      %p83 = scmp.eq.s32.totalorder %s35, 1
      %p84 = por %p82, %p83
      %p86 = scmp.ne.s32.totalorder %s69, %s85
      %p87 = scmp.eq.s32.totalorder %s35, 0
      %p88 = por %p86, %p87
      %s90 = sadd.s32 %s89, 1
      %p93 = scmp.eq.s32.totalorder %s29, 1
      %p94 = scmp.ne.s32.totalorder %s89, %s91
      %p95 = scmp.eq.s32.totalorder %s29, 0
      %p96 = por %p94, %p95
      %p97 = scmp.ne.s32.totalorder %s89, %s91
      %p98 = scmp.eq.s32.totalorder %s34, 1
      %p99 = por %p97, %p98
      %p100 = scmp.ne.s32.totalorder %s91, %s92
      %p101 = scmp.eq.s32.totalorder %s34, 0
      %p102 = por %p100, %p101
      %p103 = scmp.ne.s32.totalorder %s91, %s92
      %p104 = scmp.eq.s32.totalorder %s35, 1
      %p105 = por %p103, %p104
      %p107 = scmp.ne.s32.totalorder %s92, %s106
      %p108 = scmp.eq.s32.totalorder %s35, 0
      %p109 = por %p107, %p108
      %s111 = sadd.s32 %s110, 1
      %p114 = scmp.eq.s32.totalorder %s29, 1
      %p115 = scmp.ne.s32.totalorder %s110, %s112
      %p116 = scmp.eq.s32.totalorder %s29, 0
      %p117 = por %p115, %p116
      %p118 = scmp.ne.s32.totalorder %s110, %s112
      %p119 = scmp.eq.s32.totalorder %s34, 1
      %p120 = por %p118, %p119
      %p121 = scmp.ne.s32.totalorder %s112, %s113
      %p122 = scmp.eq.s32.totalorder %s34, 0
      %p123 = por %p121, %p122
      %p124 = scmp.ne.s32.totalorder %s112, %s113
      %p125 = scmp.eq.s32.totalorder %s35, 1
      %p126 = por %p124, %p125
      %p128 = scmp.ne.s32.totalorder %s113, %s127
      %p129 = scmp.eq.s32.totalorder %s35, 0
      %p130 = por %p128, %p129
      %s132 = sadd.s32 %s131, 1
      %p135 = scmp.eq.s32.totalorder %s29, 1
      %p136 = scmp.ne.s32.totalorder %s131, %s133
      %p137 = scmp.eq.s32.totalorder %s29, 0
      %p138 = por %p136, %p137
      %p139 = scmp.ne.s32.totalorder %s131, %s133
      %p140 = scmp.eq.s32.totalorder %s34, 1
      %p141 = por %p139, %p140
      %p142 = scmp.ne.s32.totalorder %s133, %s134
      %p143 = scmp.eq.s32.totalorder %s34, 0
      %p144 = por %p142, %p143
      %p145 = scmp.ne.s32.totalorder %s133, %s134
      %p146 = scmp.eq.s32.totalorder %s35, 1
      %p147 = por %p145, %p146
      %p149 = scmp.ne.s32.totalorder %s134, %s148
      %p150 = scmp.eq.s32.totalorder %s35, 0
      %p151 = por %p149, %p150
      %s153 = sadd.s32 %s152, 1
      %p156 = scmp.eq.s32.totalorder %s29, 1
      %p157 = scmp.ne.s32.totalorder %s152, %s154
      %p158 = scmp.eq.s32.totalorder %s29, 0
      %p159 = por %p157, %p158
      %p160 = scmp.ne.s32.totalorder %s152, %s154
      %p161 = scmp.eq.s32.totalorder %s34, 1
      %p162 = por %p160, %p161
      %p163 = scmp.ne.s32.totalorder %s154, %s155
      %p164 = scmp.eq.s32.totalorder %s34, 0
      %p165 = por %p163, %p164
      %p166 = scmp.ne.s32.totalorder %s154, %s155
      %p167 = scmp.eq.s32.totalorder %s35, 1
      %p168 = por %p166, %p167
      %p170 = scmp.ne.s32.totalorder %s155, %s169
      %p171 = scmp.eq.s32.totalorder %s35, 0
      %p172 = por %p170, %p171
      %s174 = sadd.s32 %s173, 1
      %p177 = scmp.eq.s32.totalorder %s29, 1
      %p178 = scmp.ne.s32.totalorder %s173, %s175
      %p179 = scmp.eq.s32.totalorder %s29, 0
      %p180 = por %p178, %p179
      %p181 = scmp.ne.s32.totalorder %s173, %s175
      %p182 = scmp.eq.s32.totalorder %s34, 1
      %p183 = por %p181, %p182
      %p184 = scmp.ne.s32.totalorder %s175, %s176
      %p185 = scmp.eq.s32.totalorder %s34, 0
      %p186 = por %p184, %p185
      %p187 = scmp.ne.s32.totalorder %s175, %s176
      %p188 = scmp.eq.s32.totalorder %s35, 1
      %p189 = por %p187, %p188
      %p191 = scmp.ne.s32.totalorder %s176, %s190
      %p192 = scmp.eq.s32.totalorder %s35, 0
      %p193 = por %p191, %p192
      %s195 = sadd.s32 %s194, 1
      %p198 = scmp.eq.s32.totalorder %s29, 1
      %p199 = scmp.ne.s32.totalorder %s194, %s196
      %p200 = scmp.eq.s32.totalorder %s29, 0
      %p201 = por %p199, %p200
      %p202 = scmp.ne.s32.totalorder %s194, %s196
      %p203 = scmp.eq.s32.totalorder %s34, 1
      %p204 = por %p202, %p203
      %p205 = scmp.ne.s32.totalorder %s196, %s197
      %p206 = scmp.eq.s32.totalorder %s34, 0
      %p207 = por %p205, %p206
      %p208 = scmp.ne.s32.totalorder %s196, %s197
      %p209 = scmp.eq.s32.totalorder %s35, 1
      %p210 = por %p208, %p209
      %p212 = scmp.ne.s32.totalorder %s197, %s211
      %p213 = scmp.eq.s32.totalorder %s35, 0
      %p214 = por %p212, %p213
      %s216 = sadd.s32 %s215, 1
      %p219 = scmp.eq.s32.totalorder %s29, 1
      %p220 = scmp.ne.s32.totalorder %s215, %s217
      %p221 = scmp.eq.s32.totalorder %s29, 0
      %p222 = por %p220, %p221
      %p223 = scmp.ne.s32.totalorder %s215, %s217
      %p224 = scmp.eq.s32.totalorder %s34, 1
      %p225 = por %p223, %p224
      %p226 = scmp.ne.s32.totalorder %s217, %s218
      %p227 = scmp.eq.s32.totalorder %s34, 0
      %p228 = por %p226, %p227
      %p229 = scmp.ne.s32.totalorder %s217, %s218
      %p230 = scmp.eq.s32.totalorder %s35, 1
      %p231 = por %p229, %p230
      %p233 = scmp.ne.s32.totalorder %s218, %s232
      %p234 = scmp.eq.s32.totalorder %s35, 0
      %p235 = por %p233, %p234
      %s237 = sadd.s32 %s236, 1
      %p240 = scmp.eq.s32.totalorder %s29, 1
      %p241 = scmp.ne.s32.totalorder %s236, %s238
      %p242 = scmp.eq.s32.totalorder %s29, 0
      %p243 = por %p241, %p242
      %p244 = scmp.ne.s32.totalorder %s236, %s238
      %p245 = scmp.eq.s32.totalorder %s34, 1
      %p246 = por %p244, %p245
      %p247 = scmp.ne.s32.totalorder %s238, %s239
      %p248 = scmp.eq.s32.totalorder %s34, 0
      %p249 = por %p247, %p248
      %p250 = scmp.ne.s32.totalorder %s238, %s239
      %p251 = scmp.eq.s32.totalorder %s35, 1
      %p252 = por %p250, %p251
      %p254 = scmp.ne.s32.totalorder %s239, %s253
      %p255 = scmp.eq.s32.totalorder %s35, 0
      %p256 = por %p254, %p255
      %s257 = ssub.s32 %s29, %s36
      %p258 = scmp.eq.s32.totalorder %s257, 0
      %s260 = sadd.s32 %s259, 1
      %s261 = scalar_select %p258, %s259, %s260
      %p264 = pneg %p258
      %p265 = scmp.eq.s32.totalorder %s29, 1
      %p266 = por %p264, %p265
      %p267 = scmp.ne.s32.totalorder %s259, %s262
      %p268 = scmp.eq.s32.totalorder %s29, 0
      %p269 = por %p267, %p268
      %p270 = scmp.ne.s32.totalorder %s259, %s262
      %p271 = scmp.eq.s32.totalorder %s34, 1
      %p272 = por %p270, %p271
      %p273 = scmp.ne.s32.totalorder %s262, %s263
      %p274 = scmp.eq.s32.totalorder %s34, 0
      %p275 = por %p273, %p274
      %p276 = scmp.ne.s32.totalorder %s262, %s263
      %p277 = scmp.eq.s32.totalorder %s35, 1
      %p278 = por %p276, %p277
      %p280 = scmp.ne.s32.totalorder %s263, %s279
      %p281 = scmp.eq.s32.totalorder %s35, 0
      %p282 = por %p280, %p281
      %p283 = scmp.le.s32.totalorder 1, %s29
      %p284 = scmp.lt.s32.totalorder %s29, 3
      %p285 = pnand %p283, %p284
      %p286 = pneg %p285
      // Predicated region
      $region9: #{decoder_forward.1} parent=5 // pred_check
        _
      $region10: #{decoder_forward.1} parent=5 // pred_check_branch
        %288 = sbr.rel (%p285) target = $region12
      $region11: #{decoder_forward.1} parent=5 // pred_region
        %s289 = ssub.s32 %s29, 1
        // Predicated region
        $region13: #{decoder_forward.1} parent=11 // pred_check
          %p290 = pneg %p102
        $region14: #{decoder_forward.1} parent=11 // pred_check_branch
          %292 = sbr.rel (%p290) target = $region16
        $region15: #{decoder_forward.1} parent=11 // pred_region
          %s294 = ssub.s32 1024, 1024
          %295 = vsyncadd [#allocation6], %s294
          %s296 = sshll.u32 [#allocation7], 4
          %s297 = int_to_ptr.vmem [resolvable:$true] %s296
          %302 = dma.hbm_to_vmem [thread:$0]  %s2, 1024, %s297, [#allocation6], 128, 128, 8
        $region16: #{decoder_forward.1} parent=11 // pred_fallthru
          _
        // Predicated region
        $region17: #{decoder_forward.1} parent=11 // pred_check
          %p303 = pneg %p123
        $region18: #{decoder_forward.1} parent=11 // pred_check_branch
          %305 = sbr.rel (%p303) target = $region20
        $region19: #{decoder_forward.1} parent=11 // pred_region
          %s307 = ssub.s32 256, 256
          %308 = vsyncadd [#allocation9], %s307
          %s309 = sshll.u32 [#allocation8], 4
          %s310 = int_to_ptr.vmem [resolvable:$true] %s309
          %315 = dma.hbm_to_vmem [thread:$0]  %s3, 256, %s310, [#allocation9], 128, 128, 8
        $region20: #{decoder_forward.1} parent=11 // pred_fallthru
          _
        // Predicated region
        $region21: #{decoder_forward.1} parent=11 // pred_check
          %p316 = pneg %p144
        $region22: #{decoder_forward.1} parent=11 // pred_check_branch
          %318 = sbr.rel (%p316) target = $region24
        $region23: #{decoder_forward.1} parent=11 // pred_region
          %s320 = ssub.s32 32, 32
          %321 = vsyncadd [#allocation9], %s320
          %s323 = sshll.u32 [#allocation10], 4
          %s324 = int_to_ptr.vmem [resolvable:$true] %s323
          %326 = dma.hbm_to_vmem [thread:$0]  %s4, 32, %s324, [#allocation9]
        $region24: #{decoder_forward.1} parent=11 // pred_fallthru
          _
        // Predicated region
        $region25: #{decoder_forward.1} parent=11 // pred_check
          %p327 = pneg %p165
        $region26: #{decoder_forward.1} parent=11 // pred_check_branch
          %329 = sbr.rel (%p327) target = $region28
        $region27: #{decoder_forward.1} parent=11 // pred_region
          %s331 = ssub.s32 32, 32
          %332 = vsyncadd [#allocation12], %s331
          %s334 = sshll.u32 [#allocation11], 4
          %s335 = int_to_ptr.vmem [resolvable:$true] %s334
          %337 = dma.hbm_to_vmem [thread:$0]  %s5, 32, %s335, [#allocation12]
        $region28: #{decoder_forward.1} parent=11 // pred_fallthru
          _
        // Predicated region
        $region29: #{decoder_forward.1} parent=11 // pred_check
          %p338 = pneg %p186
        $region30: #{decoder_forward.1} parent=11 // pred_check_branch
          %340 = sbr.rel (%p338) target = $region32
        $region31: #{decoder_forward.1} parent=11 // pred_region
          %s342 = ssub.s32 32, 32
          %343 = vsyncadd [#allocation12], %s342
          %s345 = sshll.u32 [#allocation13], 4
          %s346 = int_to_ptr.vmem [resolvable:$true] %s345
          %348 = dma.hbm_to_vmem [thread:$0]  %s6, 32, %s346, [#allocation12]
        $region32: #{decoder_forward.1} parent=11 // pred_fallthru
          _
        // Predicated region
        $region33: #{decoder_forward.1} parent=11 // pred_check
          %p349 = pneg %p207
        $region34: #{decoder_forward.1} parent=11 // pred_check_branch
          %351 = sbr.rel (%p349) target = $region36
        $region35: #{decoder_forward.1} parent=11 // pred_region
          %s353 = ssub.s32 64, 64
          %354 = vsyncadd [#allocation15], %s353
          %s356 = sshll.u32 [#allocation14], 4
          %s357 = int_to_ptr.vmem [resolvable:$true] %s356
          %359 = dma.hbm_to_vmem [thread:$0]  %s7, 64, %s357, [#allocation15]
        $region36: #{decoder_forward.1} parent=11 // pred_fallthru
          _
        // Predicated region
        $region37: #{decoder_forward.1} parent=11 // pred_check
          %p360 = pneg %p228
        $region38: #{decoder_forward.1} parent=11 // pred_check_branch
          %362 = sbr.rel (%p360) target = $region40
        $region39: #{decoder_forward.1} parent=11 // pred_region
          %s364 = ssub.s32 64, 64
          %365 = vsyncadd [#allocation15], %s364
          %s367 = sshll.u32 [#allocation16], 4
          %s368 = int_to_ptr.vmem [resolvable:$true] %s367
          %370 = dma.hbm_to_vmem [thread:$0]  %s8, 64, %s368, [#allocation15]
        $region40: #{decoder_forward.1} parent=11 // pred_fallthru
          _
        // Predicated region
        $region41: #{decoder_forward.1} parent=11 // pred_check
          %p371 = pneg %p249
        $region42: #{decoder_forward.1} parent=11 // pred_check_branch
          %373 = sbr.rel (%p371) target = $region44
        $region43: #{decoder_forward.1} parent=11 // pred_region
          %s375 = ssub.s32 64, 64
          %376 = vsyncadd [#allocation18], %s375
          %s378 = sshll.u32 [#allocation17], 4
          %s379 = int_to_ptr.vmem [resolvable:$true] %s378
          %381 = dma.hbm_to_vmem [thread:$0]  %s9, 64, %s379, [#allocation18]
        $region44: #{decoder_forward.1} parent=11 // pred_fallthru
          _
      $region12: #{decoder_forward.1} parent=5 // pred_fallthru
        _
      %p382 = scmp.lt.s32.totalorder %s29, 2
      // Predicated region
      $region45: #{decoder_forward.1} parent=5 // pred_check
        %p383 = pneg %p382
      $region46: #{decoder_forward.1} parent=5 // pred_check_branch
        %385 = sbr.rel (%p383) target = $region48
      $region47: #{decoder_forward.1} parent=5 // pred_region
        // Predicated region
        $region49: #{decoder_forward.1} parent=47 // pred_check
          %p386 = pneg %p49
        $region50: #{decoder_forward.1} parent=47 // pred_check_branch
          %388 = sbr.rel (%p386) target = $region52
        $region51: #{decoder_forward.1} parent=47 // pred_region
          %s389 = sand.u32 %s39, 1
          %s390 = scalar_lea.sflag [#allocation3], %s389
          %s391 = sand.u32 %s39, 1
          %s392 = smul.addr %s391, 4
          %s393 = scalar_lea.vmem [#allocation2], %s392
          %s395 = ssub.s32 64, 64
          %396 = vsyncadd %s390, %s395
          %s397 = smul.addr %s29, 2
          %s398 = smul.addr %s397, 32
          %s399 = scalar_lea.hbm %s0, %s398
          %s401 = sshll.u32 %s393, 4
          %s402 = int_to_ptr.vmem [resolvable:$true] %s401
          %404 = dma.hbm_to_vmem [thread:$0]  %s399, 64, %s402, %s390
        $region52: #{decoder_forward.1} parent=47 // pred_fallthru
          _
        // Predicated region
        $region53: #{decoder_forward.1} parent=47 // pred_check
          %p405 = pneg %p75
        $region54: #{decoder_forward.1} parent=47 // pred_check_branch
          %407 = sbr.rel (%p405) target = $region56
        $region55: #{decoder_forward.1} parent=47 // pred_region
          %s408 = sand.u32 %s29, 1
          %s409 = scalar_lea.sflag [#allocation6], %s408
          %s410 = sand.u32 %s65, 1
          %s411 = smul.addr %s410, 4
          %s412 = scalar_lea.vmem [#allocation5], %s411
          %s414 = ssub.s32 64, 64
          %415 = vsyncadd %s409, %s414
          %s416 = smul.addr %s29, 64
          %s417 = scalar_lea.hbm %s1, %s416
          %s419 = sshll.u32 %s412, 4
          %s420 = int_to_ptr.vmem [resolvable:$true] %s419
          %422 = dma.hbm_to_vmem [thread:$0]  %s417, 64, %s420, %s409
        $region56: #{decoder_forward.1} parent=47 // pred_fallthru
          _
      $region48: #{decoder_forward.1} parent=5 // pred_fallthru
        _
      %p423 = scmp.le.s32.totalorder 1, %s29
      %p424 = scmp.lt.s32.totalorder %s29, 3
      %p425 = pnand %p423, %p424
      %p426 = pneg %p425
      // Predicated region
      $region57: #{decoder_forward.1} parent=5 // pred_check
        _
      $region58: #{decoder_forward.1} parent=5 // pred_check_branch
        %428 = sbr.rel (%p425) target = $region60
      $region59: #{decoder_forward.1} parent=5 // pred_region
        %s429 = ssub.s32 %s29, 1
        %s430 = sand.u32 %s42, 1
        %s431 = scalar_lea.sflag [#allocation3], %s430
        %s432 = sand.u32 %s42, 1
        %s433 = smul.addr %s432, 4
        %s434 = scalar_lea.vmem [#allocation2], %s433
        // Predicated region
        $region61: #{decoder_forward.1} parent=59 // pred_check
          %p435 = pneg %p55
        $region62: #{decoder_forward.1} parent=59 // pred_check_branch
          %437 = sbr.rel (%p435) target = $region64
        $region63: #{decoder_forward.1} parent=59 // pred_region
          %438 = dma.done %s431, 64
        $region64: #{decoder_forward.1} parent=59 // pred_fallthru
          _
        %s439 = sand.u32 %s34, 1
        %s440 = scalar_lea.sflag [#allocation6], %s439
        %s441 = sand.u32 %s68, 1
        %s442 = smul.addr %s441, 4
        %s443 = scalar_lea.vmem [#allocation5], %s442
        // Predicated region
        $region65: #{decoder_forward.1} parent=59 // pred_check
          %p444 = pneg %p81
        $region66: #{decoder_forward.1} parent=59 // pred_check_branch
          %446 = sbr.rel (%p444) target = $region68
        $region67: #{decoder_forward.1} parent=59 // pred_region
          %447 = dma.done %s440, 64
        $region68: #{decoder_forward.1} parent=59 // pred_fallthru
          _
        // Predicated region
        $region69: #{decoder_forward.1} parent=59 // pred_check
          %p448 = pneg %p102
        $region70: #{decoder_forward.1} parent=59 // pred_check_branch
          %450 = sbr.rel (%p448) target = $region72
        $region71: #{decoder_forward.1} parent=59 // pred_region
          %451 = dma.done [#allocation6], 1024
        $region72: #{decoder_forward.1} parent=59 // pred_fallthru
          _
        // Predicated region
        $region73: #{decoder_forward.1} parent=59 // pred_check
          %p452 = pneg %p123
        $region74: #{decoder_forward.1} parent=59 // pred_check_branch
          %454 = sbr.rel (%p452) target = $region76
        $region75: #{decoder_forward.1} parent=59 // pred_region
          %455 = dma.done [#allocation9], 256
        $region76: #{decoder_forward.1} parent=59 // pred_fallthru
          _
        // Predicated region
        $region77: #{decoder_forward.1} parent=59 // pred_check
          %p456 = pneg %p144
        $region78: #{decoder_forward.1} parent=59 // pred_check_branch
          %458 = sbr.rel (%p456) target = $region80
        $region79: #{decoder_forward.1} parent=59 // pred_region
          %459 = dma.done [#allocation9], 32
        $region80: #{decoder_forward.1} parent=59 // pred_fallthru
          _
        // Predicated region
        $region81: #{decoder_forward.1} parent=59 // pred_check
          %p460 = pneg %p165
        $region82: #{decoder_forward.1} parent=59 // pred_check_branch
          %462 = sbr.rel (%p460) target = $region84
        $region83: #{decoder_forward.1} parent=59 // pred_region
          %463 = dma.done [#allocation12], 32
        $region84: #{decoder_forward.1} parent=59 // pred_fallthru
          _
        // Predicated region
        $region85: #{decoder_forward.1} parent=59 // pred_check
          %p464 = pneg %p186
        $region86: #{decoder_forward.1} parent=59 // pred_check_branch
          %466 = sbr.rel (%p464) target = $region88
        $region87: #{decoder_forward.1} parent=59 // pred_region
          %467 = dma.done [#allocation12], 32
        $region88: #{decoder_forward.1} parent=59 // pred_fallthru
          _
        // Predicated region
        $region89: #{decoder_forward.1} parent=59 // pred_check
          %p468 = pneg %p207
        $region90: #{decoder_forward.1} parent=59 // pred_check_branch
          %470 = sbr.rel (%p468) target = $region92
        $region91: #{decoder_forward.1} parent=59 // pred_region
          %471 = dma.done [#allocation15], 64
        $region92: #{decoder_forward.1} parent=59 // pred_fallthru
          _
        // Predicated region
        $region93: #{decoder_forward.1} parent=59 // pred_check
          %p472 = pneg %p228
        $region94: #{decoder_forward.1} parent=59 // pred_check_branch
          %474 = sbr.rel (%p472) target = $region96
        $region95: #{decoder_forward.1} parent=59 // pred_region
          %475 = dma.done [#allocation15], 64
        $region96: #{decoder_forward.1} parent=59 // pred_fallthru
          _
        // Predicated region
        $region97: #{decoder_forward.1} parent=59 // pred_check
          %p476 = pneg %p249
        $region98: #{decoder_forward.1} parent=59 // pred_check_branch
          %478 = sbr.rel (%p476) target = $region100
        $region99: #{decoder_forward.1} parent=59 // pred_region
          %479 = dma.done [#allocation18], 64
        $region100: #{decoder_forward.1} parent=59 // pred_fallthru
          _
        %s480 = sand.u32 %s42, 1
        %s481 = scalar_lea.sflag [#allocation3], %s480
        %s482 = sand.u32 %s42, 1
        %s483 = smul.addr %s482, 4
        %s484 = scalar_lea.vmem [#allocation2], %s483
        %p485 = pneg %p55
        %p486 = pneg %p52
        %s487 = sand.u32 %s34, 1
        %s488 = scalar_lea.sflag [#allocation6], %s487
        %s489 = sand.u32 %s68, 1
        %s490 = smul.addr %s489, 4
        %s491 = scalar_lea.vmem [#allocation5], %s490
        %p492 = pneg %p81
        %p493 = pneg %p78
        %p494 = pneg %p102
        %p495 = pneg %p99
        %p496 = pneg %p123
        %p497 = pneg %p120
        %p498 = pneg %p144
        %p499 = pneg %p141
        %p500 = pneg %p165
        %p501 = pneg %p162
        %p502 = pneg %p186
        %p503 = pneg %p183
        %p504 = pneg %p207
        %p505 = pneg %p204
        %p506 = pneg %p228
        %p507 = pneg %p225
        %p508 = pneg %p249
        %p509 = pneg %p246
        %p510 = pneg %p275
        %p511 = pneg %p272
        %s512 = sand.u32 %s262, 1
        %s513 = scalar_lea.sflag [#allocation4], %s512
        %s514 = sand.u32 %s262, 1
        %s515 = smul.addr %s514, 8
        %s516 = scalar_lea.vmem [#allocation19], %s515
        %v518 = vld [vmem:[%s434] sm:$0xf]
        %v519 = vld [vmem:[%s443] sm:$0xf]
        %v520 = vld [vmem:[#allocation7] sm:$0xff]
        %v521 = vld [vmem:[#allocation7 + $0x8] sm:$0xff]
        %v522 = vld [vmem:[#allocation7 + $0x10] sm:$0xff]
        %v523 = vld [vmem:[#allocation7 + $0x18] sm:$0xff]
        %v524 = vld [vmem:[#allocation7 + $0x20] sm:$0xff]
        %v525 = vld [vmem:[#allocation7 + $0x28] sm:$0xff]
        %v526 = vld [vmem:[#allocation7 + $0x30] sm:$0xff]
        %v527 = vld [vmem:[#allocation7 + $0x38] sm:$0xff]
        %v536 = vunpack.c.l.b16 %v520
        %v537 = vunpack.c.h.b16 %v520
        %v538 = vunpack.c.l.b16 %v521
        %v539 = vunpack.c.h.b16 %v521
        %v540 = vunpack.c.l.b16 %v522
        %v541 = vunpack.c.h.b16 %v522
        %v542 = vunpack.c.l.b16 %v523
        %v543 = vunpack.c.h.b16 %v523
        %v544 = vunpack.c.l.b16 %v524
        %v545 = vunpack.c.h.b16 %v524
        %v546 = vunpack.c.l.b16 %v525
        %v547 = vunpack.c.h.b16 %v525
        %v548 = vunpack.c.l.b16 %v526
        %v549 = vunpack.c.h.b16 %v526
        %v550 = vunpack.c.l.b16 %v527
        %v551 = vunpack.c.h.b16 %v527
        %v552 = vpack.c.b16 %v538, %v536
        %v553 = vpack.c.b16 %v539, %v537
        %v554 = vpack.c.b16 %v542, %v540
        %v555 = vpack.c.b16 %v543, %v541
        %v556 = vpack.c.b16 %v546, %v544
        %v557 = vpack.c.b16 %v547, %v545
        %v558 = vpack.c.b16 %v550, %v548
        %v559 = vpack.c.b16 %v551, %v549
        %vm568 = vcmask 523264
        %v570 = vsel %vm568, %v519, 0
        %572 = vmatprep.subr.bf16.mxu0 %v553
        %573 = vmatpush1.bf16.msra.mxu0 %v552
        %574 = vmatprep.subr.bf16.mxu0 %v555
        %575 = vmatpush1.bf16.msra.mxu0 %v554
        %576 = vmatprep.subr.bf16.mxu0 %v557
        %577 = vmatpush1.bf16.msra.mxu0 %v556
        %578 = vmatprep.subr.bf16.mxu0 %v559
        %579 = vmatpush1.bf16.msra.mxu0 %v558
        %580 = vmatprep.subr.bf16.mxu0 0
        %581 = vmatpush1.bf16.msra.mxu0 0
        %582 = vmatprep.subr.bf16.mxu0 0
        %583 = vmatpush1.bf16.msra.mxu0 0
        %584 = vmatprep.subr.bf16.mxu0 0
        %585 = vmatpush1.bf16.msra.mxu0 0
        %586 = vmatprep.subr.bf16.mxu0 0
        %587 = vmatpush1.bf16.msra.mxu0 0
        %588 = vmatprep.subr.bf16.mxu0 0
        %589 = vmatpush1.bf16.msra.mxu0 0
        %590 = vmatprep.subr.bf16.mxu0 0
        %591 = vmatpush1.bf16.msra.mxu0 0
        %592 = vmatprep.subr.bf16.mxu0 0
        %593 = vmatpush1.bf16.msra.mxu0 0
        %594 = vmatprep.subr.bf16.mxu0 0
        %595 = vmatpush1.bf16.msra.mxu0 0
        %596 = vmatprep.subr.bf16.mxu0 0
        %597 = vmatpush1.bf16.msra.mxu0 0
        %598 = vmatprep.subr.bf16.mxu0 0
        %599 = vmatpush1.bf16.msra.mxu0 0
        %600 = vmatprep.subr.bf16.mxu0 0
        %601 = vmatpush1.bf16.msra.mxu0 0
        %602 = vmatprep.subr.bf16.mxu0 0
        %603 = vmatpush1.bf16.msra.mxu0 0
        %604 = vmatprep.mubr.bf16.mxu0 0
        %605 = vmatmul.mubr.bf16.gmra.mrb[0].mxu0 %v570
        %v606 = vpop.f32.mrb[0].mxu0
        %v607 = vadd.f32 0.0, %v606
        %v608 = vpop.f32.mrb[0].mxu0
        %v609 = vadd.f32 0.0, %v608
        %v610 = vpop.f32.mrb[0].mxu0
        %v611 = vpop.f32.mrb[0].mxu0
        %612 = vdwg.mxu0
        %v613 = vpack.c.bf16 %v607, %v607
        %v614 = vpack.c.bf16 %v609, %v609
        %616 = vrot.lane.b32.xlu0 %v614, 17
        %v617 = vpop.permute.xlu0 %616
        %619 = vrot.lane.b32.xlu0 %v613, 17
        %v620 = vpop.permute.xlu0 %619
        %vm621 = vcmask 138240
        %v622 = vsel %vm621, %v620, %v617
        %vm624 = vcmask 138240
        %v627 = vsel %vm624, %v617, %v620
        %v629 = vld [vmem:[#allocation8] sm:$0x11]
        %v631 = vunpack.c.l.b16 %v629
        %v632 = vunpack.c.h.b16 %v629
        %v633 = vpack.c.b16 %v631, %v631
        %v634 = vpack.c.b16 %v632, %v632
        %v636 = vpack.i.b16 %v633, %v633
        %v638 = vlaneseq
        %v639 = vshrl.u32 %v638, 7
        %v640 = vsub.s32 0, %v639
        %v641 = vrot.slane %v636, %v640
        %v643 = vpack.i.b16 %v634, %v634
        %v645 = vlaneseq
        %v646 = vshrl.u32 %v645, 7
        %v647 = vsub.s32 0, %v646
        %v648 = vrot.slane %v643, %v647
        %v649 = vmul.bf16 %v627, %v641
        %v650 = vmul.bf16 %v622, %v648
        %651 = vrot.lane.b32.xlu0 %v614, 16
        %v652 = vpop.permute.xlu0 %651
        %653 = vrot.lane.b32.xlu0 %v613, 16
        %v654 = vpop.permute.xlu0 %653
        %vm655 = vcmask 130048
        %v656 = vsel %vm655, %v654, %v652
        %vm658 = vcmask 130048
        %v661 = vsel %vm658, %v652, %v654
        %v663 = vshrl.u32 %v633, 16
        %v664 = vpack.i.b16 %v663, %v663
        %v666 = vlaneseq
        %v667 = vshrl.u32 %v666, 7
        %v668 = vsub.s32 0, %v667
        %v669 = vrot.slane %v664, %v668
        %v670 = vshrl.u32 %v634, 16
        %v671 = vpack.i.b16 %v670, %v670
        %v673 = vlaneseq
        %v674 = vshrl.u32 %v673, 7
        %v675 = vsub.s32 0, %v674
        %v676 = vrot.slane %v671, %v675
        %v677 = vmul.bf16 %v661, %v669
        %v678 = vmul.bf16 %v656, %v676
        %679 = vrot.lane.b32.xlu0 %v614, 15
        %v680 = vpop.permute.xlu0 %679
        %681 = vrot.lane.b32.xlu0 %v613, 15
        %v682 = vpop.permute.xlu0 %681
        %vm683 = vcmask 121856
        %v684 = vsel %vm683, %v682, %v680
        %vm686 = vcmask 121856
        %v689 = vsel %vm686, %v680, %v682
        %v691 = vld [vmem:[#allocation8] sm:$0x22]
        %v693 = vunpack.c.l.b16 %v691
        %v694 = vunpack.c.h.b16 %v691
        %v695 = vpack.c.b16 %v693, %v693
        %v696 = vpack.c.b16 %v694, %v694
        %v698 = vpack.i.b16 %v695, %v695
        %v700 = vlaneseq
        %v701 = vshrl.u32 %v700, 7
        %v702 = vsub.s32 1, %v701
        %v703 = vrot.slane %v698, %v702
        %v705 = vpack.i.b16 %v696, %v696
        %v707 = vlaneseq
        %v708 = vshrl.u32 %v707, 7
        %v709 = vsub.s32 1, %v708
        %v710 = vrot.slane %v705, %v709
        %v711 = vmul.bf16 %v689, %v703
        %v712 = vmul.bf16 %v684, %v710
        %713 = vrot.lane.b32.xlu0 %v614, 1
        %v714 = vpop.permute.xlu0 %713
        %715 = vrot.lane.b32.xlu0 %v613, 1
        %v716 = vpop.permute.xlu0 %715
        %vm717 = vcmask 7168
        %v718 = vsel %vm717, %v716, %v714
        %vm720 = vcmask 7168
        %v723 = vsel %vm720, %v714, %v716
        %v725 = vshrl.u32 %v695, 16
        %v726 = vpack.i.b16 %v725, %v725
        %v728 = vlaneseq
        %v729 = vshrl.u32 %v728, 7
        %v730 = vsub.s32 1, %v729
        %v731 = vrot.slane %v726, %v730
        %v732 = vshrl.u32 %v696, 16
        %v733 = vpack.i.b16 %v732, %v732
        %v735 = vlaneseq
        %v736 = vshrl.u32 %v735, 7
        %v737 = vsub.s32 1, %v736
        %v738 = vrot.slane %v733, %v737
        %v739 = vmul.bf16 %v723, %v731
        %v740 = vmul.bf16 %v718, %v738
        %v741 = vld [vmem:[#allocation8] sm:$0x44]
        %v743 = vunpack.c.l.b16 %v741
        %v744 = vunpack.c.h.b16 %v741
        %v745 = vpack.c.b16 %v743, %v743
        %v746 = vpack.c.b16 %v744, %v744
        %v748 = vpack.i.b16 %v745, %v745
        %v750 = vlaneseq
        %v751 = vshrl.u32 %v750, 7
        %v752 = vsub.s32 2, %v751
        %v753 = vrot.slane %v748, %v752
        %v755 = vpack.i.b16 %v746, %v746
        %v757 = vlaneseq
        %v758 = vshrl.u32 %v757, 7
        %v759 = vsub.s32 2, %v758
        %v760 = vrot.slane %v755, %v759
        %v761 = vmul.bf16 %v613, %v753
        %v762 = vmul.bf16 %v614, %v760
        %763 = vrot.lane.b32.xlu0 %v613, 127
        %v764 = vpop.permute.xlu0 %763
        %765 = vrot.lane.b32.xlu0 %v614, 127
        %v766 = vpop.permute.xlu0 %765
        %vm767 = vcmask 1039360
        %v768 = vsel %vm767, %v764, %v766
        %vm770 = vcmask 1039360
        %v773 = vsel %vm770, %v766, %v764
        %v775 = vshrl.u32 %v745, 16
        %v776 = vpack.i.b16 %v775, %v775
        %v778 = vlaneseq
        %v779 = vshrl.u32 %v778, 7
        %v780 = vsub.s32 2, %v779
        %v781 = vrot.slane %v776, %v780
        %v782 = vshrl.u32 %v746, 16
        %v783 = vpack.i.b16 %v782, %v782
        %v785 = vlaneseq
        %v786 = vshrl.u32 %v785, 7
        %v787 = vsub.s32 2, %v786
        %v788 = vrot.slane %v783, %v787
        %v789 = vmul.bf16 %v768, %v781
        %v790 = vmul.bf16 %v773, %v788
        %791 = vrot.lane.b32.xlu0 %v613, 113
        %v792 = vpop.permute.xlu0 %791
        %793 = vrot.lane.b32.xlu0 %v614, 113
        %v794 = vpop.permute.xlu0 %793
        %vm795 = vcmask 924672
        %v796 = vsel %vm795, %v792, %v794
        %vm798 = vcmask 924672
        %v801 = vsel %vm798, %v794, %v792
        %v803 = vld [vmem:[#allocation8] sm:$0x88]
        %v805 = vunpack.c.l.b16 %v803
        %v806 = vunpack.c.h.b16 %v803
        %v807 = vpack.c.b16 %v805, %v805
        %v808 = vpack.c.b16 %v806, %v806
        %v810 = vpack.i.b16 %v807, %v807
        %v812 = vlaneseq
        %v813 = vshrl.u32 %v812, 7
        %v814 = vsub.s32 3, %v813
        %v815 = vrot.slane %v810, %v814
        %v817 = vpack.i.b16 %v808, %v808
        %v819 = vlaneseq
        %v820 = vshrl.u32 %v819, 7
        %v821 = vsub.s32 3, %v820
        %v822 = vrot.slane %v817, %v821
        %v823 = vmul.bf16 %v796, %v815
        %v824 = vmul.bf16 %v801, %v822
        %825 = vrot.lane.b32.xlu0 %v613, 112
        %v826 = vpop.permute.xlu0 %825
        %827 = vrot.lane.b32.xlu0 %v614, 112
        %v828 = vpop.permute.xlu0 %827
        %vm829 = vcmask 916480
        %v830 = vsel %vm829, %v826, %v828
        %vm832 = vcmask 916480
        %v835 = vsel %vm832, %v828, %v826
        %v837 = vshrl.u32 %v807, 16
        %v838 = vpack.i.b16 %v837, %v837
        %v840 = vlaneseq
        %v841 = vshrl.u32 %v840, 7
        %v842 = vsub.s32 3, %v841
        %v843 = vrot.slane %v838, %v842
        %v844 = vshrl.u32 %v808, 16
        %v845 = vpack.i.b16 %v844, %v844
        %v847 = vlaneseq
        %v848 = vshrl.u32 %v847, 7
        %v849 = vsub.s32 3, %v848
        %v850 = vrot.slane %v845, %v849
        %v851 = vmul.bf16 %v830, %v843
        %v852 = vmul.bf16 %v835, %v850
        %853 = vrot.lane.b32.xlu0 %v613, 111
        %v854 = vpop.permute.xlu0 %853
        %855 = vrot.lane.b32.xlu0 %v614, 111
        %v856 = vpop.permute.xlu0 %855
        %vm857 = vcmask 908288
        %v858 = vsel %vm857, %v854, %v856
        %vm860 = vcmask 908288
        %v863 = vsel %vm860, %v856, %v854
        %v865 = vld [vmem:[#allocation8 + $0x8] sm:$0x11]
        %v867 = vunpack.c.l.b16 %v865
        %v868 = vunpack.c.h.b16 %v865
        %v869 = vpack.c.b16 %v867, %v867
        %v870 = vpack.c.b16 %v868, %v868
        %v872 = vpack.i.b16 %v869, %v869
        %v874 = vlaneseq
        %v875 = vshrl.u32 %v874, 7
        %v876 = vsub.s32 0, %v875
        %v877 = vrot.slane %v872, %v876
        %v879 = vpack.i.b16 %v870, %v870
        %v881 = vlaneseq
        %v882 = vshrl.u32 %v881, 7
        %v883 = vsub.s32 0, %v882
        %v884 = vrot.slane %v879, %v883
        %v885 = vmul.bf16 %v858, %v877
        %v886 = vmul.bf16 %v863, %v884
        %v889 = vrot.slane %v677, 4
        %v890 = vrot.slane %v678, 4
        %v893 = vrot.slane %v739, 4
        %v894 = vrot.slane %v740, 4
        %v897 = vrot.slane %v789, 4
        %v898 = vrot.slane %v790, 4
        %v901 = vrot.slane %v851, 4
        %v902 = vrot.slane %v852, 4
        %vm903 = vcmask 1043456
        %v906 = vsel %vm903, %v649, %v889
        %v910 = vsel %vm903, %v650, %v890
        %v914 = vsel %vm903, %v711, %v893
        %v918 = vsel %vm903, %v712, %v894
        %v922 = vsel %vm903, %v761, %v897
        %v926 = vsel %vm903, %v762, %v898
        %v930 = vsel %vm903, %v823, %v901
        %v934 = vsel %vm903, %v824, %v902
        %v936 = vld [vmem:[#allocation10] sm:$0x3]
        %v937 = vld [vmem:[#allocation14] sm:$0xf]
        %939 = vset.pattern.permute.xlu0 0
        %940 = vperm.xlu0 %939, %v937
        %v941 = vpop.permute.xlu0 %940
        %vm943 = vcmask 588800
        %v945 = vsel %vm943, %v936, 0
        %v948 = vsel %vm903, %v885, 0
        %v951 = vsel %vm903, %v886, 0
        %953 = vmatprep.subr.bf16.mxu0 %v910
        %954 = vmatpush1.bf16.msra.mxu0 %v906
        %955 = vmatprep.subr.bf16.mxu0 %v918
        %956 = vmatpush1.bf16.msra.mxu0 %v914
        %957 = vmatprep.subr.bf16.mxu0 %v926
        %958 = vmatpush1.bf16.msra.mxu0 %v922
        %959 = vmatprep.subr.bf16.mxu0 %v934
        %960 = vmatpush1.bf16.msra.mxu0 %v930
        %961 = vmatprep.subr.bf16.mxu0 %v951
        %962 = vmatpush1.bf16.msra.mxu0 %v948
        %963 = vmatprep.subr.bf16.mxu0 0
        %964 = vmatpush1.bf16.msra.mxu0 0
        %965 = vmatprep.subr.bf16.mxu0 0
        %966 = vmatpush1.bf16.msra.mxu0 0
        %967 = vmatprep.subr.bf16.mxu0 0
        %968 = vmatpush1.bf16.msra.mxu0 0
        %969 = vmatprep.subr.bf16.mxu0 0
        %970 = vmatpush1.bf16.msra.mxu0 0
        %971 = vmatprep.subr.bf16.mxu0 0
        %972 = vmatpush1.bf16.msra.mxu0 0
        %973 = vmatprep.subr.bf16.mxu0 0
        %974 = vmatpush1.bf16.msra.mxu0 0
        %975 = vmatprep.subr.bf16.mxu0 0
        %976 = vmatpush1.bf16.msra.mxu0 0
        %977 = vmatprep.subr.bf16.mxu0 0
        %978 = vmatpush1.bf16.msra.mxu0 0
        %979 = vmatprep.subr.bf16.mxu0 0
        %980 = vmatpush1.bf16.msra.mxu0 0
        %981 = vmatprep.subr.bf16.mxu0 0
        %982 = vmatpush1.bf16.msra.mxu0 0
        %983 = vmatprep.subr.bf16.mxu0 0
        %984 = vmatpush1.bf16.msra.mxu0 0
        %985 = vmatprep.mubr.bf16.mxu0 0
        %986 = vmatmul.mubr.bf16.gmra.mrb[0].mxu0 %v945
        %v987 = vpop.f32.mrb[0].mxu0
        %v988 = vadd.f32 %v941, %v987
        %v989 = vpop.f32.mrb[0].mxu0
        %v990 = vadd.f32 %v941, %v989
        %v991 = vpop.f32.mrb[0].mxu0
        %v992 = vpop.f32.mrb[0].mxu0
        %993 = vdwg.mxu0
        %v994 = vpack.c.bf16 %v988, %v988
        %v995 = vpack.c.bf16 %v990, %v990
        %v998 = vunpack.c.l.s4 1983009808
        %v999 = vunpack.c.0.s8 %v998
        %v1000 = vlaneseq
        %v1001 = vshrl.u32 %v1000, 7
        %v1002 = vsub.s32 %v999, %v1001
        %v1003 = vrot.slane %v518, %v1002
        %v1004 = vcombine.high %v1003, %v1003
        %v1007 = vrot.slane %v994, 6
        %v1008 = vrot.slane %v995, 6
        %vm1009 = vcmask 1041408
        %v1012 = vsel %vm1009, %v1003, %v1007
        %v1016 = vsel %vm1009, %v1004, %v1008
        %1019 = vrot.lane.b32.xlu0 %v1016, 17
        %v1020 = vpop.permute.xlu0 %1019
        %1022 = vrot.lane.b32.xlu0 %v1012, 17
        %v1023 = vpop.permute.xlu0 %1022
        %v1024 = vsel %vm621, %v1023, %v1020
        %v1028 = vsel %vm624, %v1020, %v1023
        %v1030 = vmul.bf16 %v1028, %v641
        %v1031 = vmul.bf16 %v1024, %v648
        %1032 = vrot.lane.b32.xlu0 %v1016, 16
        %v1033 = vpop.permute.xlu0 %1032
        %1034 = vrot.lane.b32.xlu0 %v1012, 16
        %v1035 = vpop.permute.xlu0 %1034
        %v1036 = vsel %vm655, %v1035, %v1033
        %v1040 = vsel %vm658, %v1033, %v1035
        %v1042 = vmul.bf16 %v1040, %v669
        %v1043 = vmul.bf16 %v1036, %v676
        %1044 = vrot.lane.b32.xlu0 %v1016, 15
        %v1045 = vpop.permute.xlu0 %1044
        %1046 = vrot.lane.b32.xlu0 %v1012, 15
        %v1047 = vpop.permute.xlu0 %1046
        %v1048 = vsel %vm683, %v1047, %v1045
        %v1052 = vsel %vm686, %v1045, %v1047
        %v1054 = vmul.bf16 %v1052, %v703
        %v1055 = vmul.bf16 %v1048, %v710
        %1056 = vrot.lane.b32.xlu0 %v1016, 1
        %v1057 = vpop.permute.xlu0 %1056
        %1058 = vrot.lane.b32.xlu0 %v1012, 1
        %v1059 = vpop.permute.xlu0 %1058
        %v1060 = vsel %vm717, %v1059, %v1057
        %v1064 = vsel %vm720, %v1057, %v1059
        %v1066 = vmul.bf16 %v1064, %v731
        %v1067 = vmul.bf16 %v1060, %v738
        %v1068 = vmul.bf16 %v1012, %v753
        %v1069 = vmul.bf16 %v1016, %v760
        %1070 = vrot.lane.b32.xlu0 %v1012, 127
        %v1071 = vpop.permute.xlu0 %1070
        %1072 = vrot.lane.b32.xlu0 %v1016, 127
        %v1073 = vpop.permute.xlu0 %1072
        %v1074 = vsel %vm767, %v1071, %v1073
        %v1078 = vsel %vm770, %v1073, %v1071
        %v1080 = vmul.bf16 %v1074, %v781
        %v1081 = vmul.bf16 %v1078, %v788
        %1082 = vrot.lane.b32.xlu0 %v1012, 113
        %v1083 = vpop.permute.xlu0 %1082
        %1084 = vrot.lane.b32.xlu0 %v1016, 113
        %v1085 = vpop.permute.xlu0 %1084
        %v1086 = vsel %vm795, %v1083, %v1085
        %v1090 = vsel %vm798, %v1085, %v1083
        %v1092 = vmul.bf16 %v1086, %v815
        %v1093 = vmul.bf16 %v1090, %v822
        %1094 = vrot.lane.b32.xlu0 %v1012, 112
        %v1095 = vpop.permute.xlu0 %1094
        %1096 = vrot.lane.b32.xlu0 %v1016, 112
        %v1097 = vpop.permute.xlu0 %1096
        %v1098 = vsel %vm829, %v1095, %v1097
        %v1102 = vsel %vm832, %v1097, %v1095
        %v1104 = vmul.bf16 %v1098, %v843
        %v1105 = vmul.bf16 %v1102, %v850
        %1106 = vrot.lane.b32.xlu0 %v1012, 111
        %v1107 = vpop.permute.xlu0 %1106
        %1108 = vrot.lane.b32.xlu0 %v1016, 111
        %v1109 = vpop.permute.xlu0 %1108
        %v1110 = vsel %vm857, %v1107, %v1109
        %v1114 = vsel %vm860, %v1109, %v1107
        %v1116 = vmul.bf16 %v1110, %v877
        %v1117 = vmul.bf16 %v1114, %v884
        %v1120 = vrot.slane %v1042, 4
        %v1121 = vrot.slane %v1043, 4
        %v1124 = vrot.slane %v1066, 4
        %v1125 = vrot.slane %v1067, 4
        %v1128 = vrot.slane %v1080, 4
        %v1129 = vrot.slane %v1081, 4
        %v1132 = vrot.slane %v1104, 4
        %v1133 = vrot.slane %v1105, 4
        %v1136 = vsel %vm903, %v1030, %v1120
        %v1140 = vsel %vm903, %v1031, %v1121
        %v1144 = vsel %vm903, %v1054, %v1124
        %v1148 = vsel %vm903, %v1055, %v1125
        %v1152 = vsel %vm903, %v1068, %v1128
        %v1156 = vsel %vm903, %v1069, %v1129
        %v1160 = vsel %vm903, %v1092, %v1132
        %v1164 = vsel %vm903, %v1093, %v1133
        %v1166 = vld [vmem:[#allocation11] sm:$0x3]
        %v1167 = vld [vmem:[#allocation16] sm:$0xf]
        %1169 = vset.pattern.permute.xlu0 0
        %1170 = vperm.xlu0 %1169, %v1167
        %v1171 = vpop.permute.xlu0 %1170
        %v1174 = vsel %vm943, %v1166, 0
        %v1177 = vsel %vm903, %v1116, 0
        %v1180 = vsel %vm903, %v1117, 0
        %1182 = vmatprep.subr.bf16.mxu0 %v1140
        %1183 = vmatpush1.bf16.msra.mxu0 %v1136
        %1184 = vmatprep.subr.bf16.mxu0 %v1148
        %1185 = vmatpush1.bf16.msra.mxu0 %v1144
        %1186 = vmatprep.subr.bf16.mxu0 %v1156
        %1187 = vmatpush1.bf16.msra.mxu0 %v1152
        %1188 = vmatprep.subr.bf16.mxu0 %v1164
        %1189 = vmatpush1.bf16.msra.mxu0 %v1160
        %1190 = vmatprep.subr.bf16.mxu0 %v1180
        %1191 = vmatpush1.bf16.msra.mxu0 %v1177
        %1192 = vmatprep.subr.bf16.mxu0 0
        %1193 = vmatpush1.bf16.msra.mxu0 0
        %1194 = vmatprep.subr.bf16.mxu0 0
        %1195 = vmatpush1.bf16.msra.mxu0 0
        %1196 = vmatprep.subr.bf16.mxu0 0
        %1197 = vmatpush1.bf16.msra.mxu0 0
        %1198 = vmatprep.subr.bf16.mxu0 0
        %1199 = vmatpush1.bf16.msra.mxu0 0
        %1200 = vmatprep.subr.bf16.mxu0 0
        %1201 = vmatpush1.bf16.msra.mxu0 0
        %1202 = vmatprep.subr.bf16.mxu0 0
        %1203 = vmatpush1.bf16.msra.mxu0 0
        %1204 = vmatprep.subr.bf16.mxu0 0
        %1205 = vmatpush1.bf16.msra.mxu0 0
        %1206 = vmatprep.subr.bf16.mxu0 0
        %1207 = vmatpush1.bf16.msra.mxu0 0
        %1208 = vmatprep.subr.bf16.mxu0 0
        %1209 = vmatpush1.bf16.msra.mxu0 0
        %1210 = vmatprep.subr.bf16.mxu0 0
        %1211 = vmatpush1.bf16.msra.mxu0 0
        %1212 = vmatprep.subr.bf16.mxu0 0
        %1213 = vmatpush1.bf16.msra.mxu0 0
        %1214 = vmatprep.mubr.bf16.mxu0 0
        %1215 = vmatmul.mubr.bf16.gmra.mrb[0].mxu0 %v1174
        %v1216 = vpop.f32.mrb[0].mxu0
        %v1217 = vadd.f32 %v1171, %v1216
        %v1218 = vpop.f32.mrb[0].mxu0
        %v1219 = vadd.f32 %v1171, %v1218
        %v1220 = vpop.f32.mrb[0].mxu0
        %v1221 = vpop.f32.mrb[0].mxu0
        %1222 = vdwg.mxu0
        %v1223 = vmax.f32 %v1217, 0.0
        %v1224 = vmax.f32 %v1219, 0.0
        %v1225 = vpack.c.bf16 %v1223, %v1223
        %v1226 = vpack.c.bf16 %v1224, %v1224
        %1228 = vrot.lane.b32.xlu0 %v1226, 17
        %v1229 = vpop.permute.xlu0 %1228
        %1231 = vrot.lane.b32.xlu0 %v1225, 17
        %v1232 = vpop.permute.xlu0 %1231
        %v1233 = vsel %vm621, %v1232, %v1229
        %v1237 = vsel %vm624, %v1229, %v1232
        %v1239 = vmul.bf16 %v1237, %v641
        %v1240 = vmul.bf16 %v1233, %v648
        %1241 = vrot.lane.b32.xlu0 %v1226, 16
        %v1242 = vpop.permute.xlu0 %1241
        %1243 = vrot.lane.b32.xlu0 %v1225, 16
        %v1244 = vpop.permute.xlu0 %1243
        %v1245 = vsel %vm655, %v1244, %v1242
        %v1249 = vsel %vm658, %v1242, %v1244
        %v1251 = vmul.bf16 %v1249, %v669
        %v1252 = vmul.bf16 %v1245, %v676
        %1253 = vrot.lane.b32.xlu0 %v1226, 15
        %v1254 = vpop.permute.xlu0 %1253
        %1255 = vrot.lane.b32.xlu0 %v1225, 15
        %v1256 = vpop.permute.xlu0 %1255
        %v1257 = vsel %vm683, %v1256, %v1254
        %v1261 = vsel %vm686, %v1254, %v1256
        %v1263 = vmul.bf16 %v1261, %v703
        %v1264 = vmul.bf16 %v1257, %v710
        %1265 = vrot.lane.b32.xlu0 %v1226, 1
        %v1266 = vpop.permute.xlu0 %1265
        %1267 = vrot.lane.b32.xlu0 %v1225, 1
        %v1268 = vpop.permute.xlu0 %1267
        %v1269 = vsel %vm717, %v1268, %v1266
        %v1273 = vsel %vm720, %v1266, %v1268
        %v1275 = vmul.bf16 %v1273, %v731
        %v1276 = vmul.bf16 %v1269, %v738
        %v1277 = vmul.bf16 %v1225, %v753
        %v1278 = vmul.bf16 %v1226, %v760
        %1279 = vrot.lane.b32.xlu0 %v1225, 127
        %v1280 = vpop.permute.xlu0 %1279
        %1281 = vrot.lane.b32.xlu0 %v1226, 127
        %v1282 = vpop.permute.xlu0 %1281
        %v1283 = vsel %vm767, %v1280, %v1282
        %v1287 = vsel %vm770, %v1282, %v1280
        %v1289 = vmul.bf16 %v1283, %v781
        %v1290 = vmul.bf16 %v1287, %v788
        %1291 = vrot.lane.b32.xlu0 %v1225, 113
        %v1292 = vpop.permute.xlu0 %1291
        %1293 = vrot.lane.b32.xlu0 %v1226, 113
        %v1294 = vpop.permute.xlu0 %1293
        %v1295 = vsel %vm795, %v1292, %v1294
        %v1299 = vsel %vm798, %v1294, %v1292
        %v1301 = vmul.bf16 %v1295, %v815
        %v1302 = vmul.bf16 %v1299, %v822
        %1303 = vrot.lane.b32.xlu0 %v1225, 112
        %v1304 = vpop.permute.xlu0 %1303
        %1305 = vrot.lane.b32.xlu0 %v1226, 112
        %v1306 = vpop.permute.xlu0 %1305
        %v1307 = vsel %vm829, %v1304, %v1306
        %v1311 = vsel %vm832, %v1306, %v1304
        %v1313 = vmul.bf16 %v1307, %v843
        %v1314 = vmul.bf16 %v1311, %v850
        %1315 = vrot.lane.b32.xlu0 %v1225, 111
        %v1316 = vpop.permute.xlu0 %1315
        %1317 = vrot.lane.b32.xlu0 %v1226, 111
        %v1318 = vpop.permute.xlu0 %1317
        %v1319 = vsel %vm857, %v1316, %v1318
        %v1323 = vsel %vm860, %v1318, %v1316
        %v1325 = vmul.bf16 %v1319, %v877
        %v1326 = vmul.bf16 %v1323, %v884
        %v1329 = vrot.slane %v1251, 6
        %v1330 = vrot.slane %v1252, 6
        %v1333 = vrot.slane %v1263, 4
        %v1334 = vrot.slane %v1264, 4
        %v1337 = vrot.slane %v1275, 2
        %v1338 = vrot.slane %v1276, 2
        %v1341 = vrot.slane %v1289, 6
        %v1342 = vrot.slane %v1290, 6
        %v1345 = vrot.slane %v1301, 4
        %v1346 = vrot.slane %v1302, 4
        %v1349 = vrot.slane %v1313, 2
        %v1350 = vrot.slane %v1314, 2
        %v1353 = vsel %vm1009, %v1239, %v1329
        %v1356 = vsel %vm1009, %v1240, %v1330
        %v1358 = vsel %vm903, %v1353, %v1333
        %v1360 = vsel %vm903, %v1356, %v1334
        %vm1361 = vcmask 1045504
        %v1363 = vsel %vm1361, %v1358, %v1337
        %v1366 = vsel %vm1361, %v1360, %v1338
        %v1370 = vsel %vm1009, %v1277, %v1341
        %v1373 = vsel %vm1009, %v1278, %v1342
        %v1375 = vsel %vm903, %v1370, %v1345
        %v1377 = vsel %vm903, %v1373, %v1346
        %v1379 = vsel %vm1361, %v1375, %v1349
        %v1382 = vsel %vm1361, %v1377, %v1350
        %v1384 = vld [vmem:[#allocation13] sm:$0x3]
        %v1385 = vld [vmem:[#allocation17] sm:$0xf]
        %1387 = vset.pattern.permute.xlu0 0
        %1388 = vperm.xlu0 %1387, %v1385
        %v1389 = vpop.permute.xlu0 %1388
        %vm1391 = vcmask 293888
        %v1393 = vsel %vm1391, %v1384, 0
        %v1396 = vsel %vm1009, %v1325, 0
        %v1399 = vsel %vm1009, %v1326, 0
        %1401 = vmatprep.subr.bf16.mxu0 %v1366
        %1402 = vmatpush1.bf16.msra.mxu0 %v1363
        %1403 = vmatprep.subr.bf16.mxu0 %v1382
        %1404 = vmatpush1.bf16.msra.mxu0 %v1379
        %1405 = vmatprep.subr.bf16.mxu0 %v1399
        %1406 = vmatpush1.bf16.msra.mxu0 %v1396
        %1407 = vmatprep.subr.bf16.mxu0 0
        %1408 = vmatpush1.bf16.msra.mxu0 0
        %1409 = vmatprep.subr.bf16.mxu0 0
        %1410 = vmatpush1.bf16.msra.mxu0 0
        %1411 = vmatprep.subr.bf16.mxu0 0
        %1412 = vmatpush1.bf16.msra.mxu0 0
        %1413 = vmatprep.subr.bf16.mxu0 0
        %1414 = vmatpush1.bf16.msra.mxu0 0
        %1415 = vmatprep.subr.bf16.mxu0 0
        %1416 = vmatpush1.bf16.msra.mxu0 0
        %1417 = vmatprep.subr.bf16.mxu0 0
        %1418 = vmatpush1.bf16.msra.mxu0 0
        %1419 = vmatprep.subr.bf16.mxu0 0
        %1420 = vmatpush1.bf16.msra.mxu0 0
        %1421 = vmatprep.subr.bf16.mxu0 0
        %1422 = vmatpush1.bf16.msra.mxu0 0
        %1423 = vmatprep.subr.bf16.mxu0 0
        %1424 = vmatpush1.bf16.msra.mxu0 0
        %1425 = vmatprep.subr.bf16.mxu0 0
        %1426 = vmatpush1.bf16.msra.mxu0 0
        %1427 = vmatprep.subr.bf16.mxu0 0
        %1428 = vmatpush1.bf16.msra.mxu0 0
        %1429 = vmatprep.subr.bf16.mxu0 0
        %1430 = vmatpush1.bf16.msra.mxu0 0
        %1431 = vmatprep.subr.bf16.mxu0 0
        %1432 = vmatpush1.bf16.msra.mxu0 0
        %1433 = vmatprep.mubr.bf16.mxu0 0
        %1434 = vmatmul.mubr.bf16.gmra.mrb[0].mxu0 %v1393
        %v1435 = vpop.f32.mrb[0].mxu0
        %v1436 = vadd.f32 %v1389, %v1435
        %v1437 = vpop.f32.mrb[0].mxu0
        %v1438 = vadd.f32 %v1389, %v1437
        %v1439 = vpop.f32.mrb[0].mxu0
        %v1440 = vpop.f32.mrb[0].mxu0
        %1441 = vdwg.mxu0
        %v1442 = vmax.f32 %v1436, 0.0
        %v1443 = vmax.f32 %v1438, 0.0
        %v1446 = vcombine.low %v1442, %v1443
        %1448 = vst [vmem:[%s516] sm:$0xff] %v1446
        %s1449 = sand.u32 %s262, 1
        %s1450 = scalar_lea.sflag [#allocation4], %s1449
        %s1451 = sand.u32 %s262, 1
        %s1452 = smul.addr %s1451, 8
        %s1453 = scalar_lea.vmem [#allocation19], %s1452
        // Predicated region
        $region101: #{decoder_forward.1} parent=59 // pred_check
          %p1454 = pneg %p272
        $region102: #{decoder_forward.1} parent=59 // pred_check_branch
          %1456 = sbr.rel (%p1454) target = $region104
        $region103: #{decoder_forward.1} parent=59 // pred_region
          %s1458 = ssub.s32 128, 128
          %1459 = vsyncadd %s1450, %s1458
          %s1460 = smul.addr %s34, 2
          %s1461 = smul.addr %s1460, 64
          %s1462 = scalar_lea.hbm %s10, %s1461
          %s1464 = sshll.u32 %s1453, 4
          %s1465 = int_to_ptr.vmem [resolvable:$true] %s1464
          %1467 = dma.vmem_to_hbm [thread:$0]  %s1465, 128, %s1462, %s1450
        $region104: #{decoder_forward.1} parent=59 // pred_fallthru
          _
      $region60: #{decoder_forward.1} parent=5 // pred_fallthru
        _
      %p1468 = scmp.le.s32.totalorder 2, %s29
      // Predicated region
      $region105: #{decoder_forward.1} parent=5 // pred_check
        %p1469 = pneg %p1468
      $region106: #{decoder_forward.1} parent=5 // pred_check_branch
        %1471 = sbr.rel (%p1469) target = $region108
      $region107: #{decoder_forward.1} parent=5 // pred_region
        %s1472 = ssub.s32 %s29, 2
        // Predicated region
        $region109: #{decoder_forward.1} parent=107 // pred_check
          %p1473 = pneg %p278
        $region110: #{decoder_forward.1} parent=107 // pred_check_branch
          %1475 = sbr.rel (%p1473) target = $region112
        $region111: #{decoder_forward.1} parent=107 // pred_region
          %s1476 = sand.u32 %s263, 1
          %s1477 = scalar_lea.sflag [#allocation4], %s1476
          %s1478 = sand.u32 %s263, 1
          %s1479 = smul.addr %s1478, 8
          %s1480 = scalar_lea.vmem [#allocation19], %s1479
          %1481 = dma.done %s1477, 128
        $region112: #{decoder_forward.1} parent=107 // pred_fallthru
          _
      $region108: #{decoder_forward.1} parent=5 // pred_fallthru
        _
    $region6: #{decoder_forward.1} parent=1 // loop_footer
      %s33 = sadd.s32 1, %s29
    $region7: #{decoder_forward.1} parent=1 // loop_footer_branch
      %28 = sbr.rel target = $region3
    $region8: #{decoder_forward.1} parent=1 // loop_exit
      _
    %1482 = vsyncpa [#allocation3], 1
    %s1483 = scalar_lea.sflag [#allocation3], 1
    %1484 = vsyncpa %s1483, 1
    %1485 = vsyncpa [#allocation6], 1
    %s1486 = scalar_lea.sflag [#allocation6], 1
    %1487 = vsyncpa %s1486, 1
    %1488 = vsyncpa [#allocation9], 1
    %1489 = vsyncpa [#allocation12], 1
    %1490 = vsyncpa [#allocation15], 1
    %1491 = vsyncpa [#allocation18], 1
    %1492 = vsyncpa [#allocation4], 1
    %s1493 = scalar_lea.sflag [#allocation4], 1
    %1494 = vsyncpa %s1493, 1

</llo_original>
